<compile_context>
chip_gen: v7x
topology: tpu7x:2x2x1
jax: 0.10.0
libtpu: 0.0.40
codegen_flags: <defaults>
</compile_context>

<pallas_src>
import functools

import jax
import jax.numpy as jnp
from jax.experimental import pallas as pl
from jax.experimental.pallas import tpu as pltpu


def _round_up(x, m):
    return ((x + m - 1) // m) * m


# ----------------------------- Pallas kernel --------------------------------
def _conv_bn_mish_kernel(a_ref, b_ref, bias_ref, o_ref):
    """Grid = (COp//tn, Mp//tm, KDp//tk) -> indices (j, i, k), k innermost.

    a_ref:    (tm, tk)              bf16 im2col patch rows (zero-padded)
    b_ref:    (KDp, tn) or (tk, tn) bf16 weight with BN scale folded in
                                    (full-KD slab is VMEM-resident per cout tile)
    bias_ref: (1, tn)               f32 folded BN bias (beta - mean*scale)
    o_ref:    (tm, tn)              f32 output block; resident across k, used as
                                    the accumulator (no scratch needed)
    """
    k = pl.program_id(2)
    tk = a_ref.shape[1]

    @pl.when(k == 0)
    def _():
        o_ref[...] = jnp.zeros_like(o_ref)

    if b_ref.shape[0] == tk:                 # streamed (tk, tn) weight tile
        b_blk = b_ref[...]
    else:                                    # VMEM-resident full-contraction slab
        kk = pl.multiple_of(k * tk, tk)
        b_blk = b_ref[pl.ds(kk, tk), :]

    o_ref[...] += jnp.dot(a_ref[...], b_blk, preferred_element_type=jnp.float32)

    @pl.when(k == pl.num_programs(2) - 1)
    def _():
        y = o_ref[...] + bias_ref[...]
        # Mish(y) = y * tanh(softplus(y)); single EUP exp + approx reciprocal.
        # tanh(softplus(y)) = ((1+e^y)^2 - 1) / ((1+e^y)^2 + 1), stable via e = exp(-|y|):
        #   y >= 0:  (1 + 2e) / (1 + 2e + 2e^2)
        #   y <  0:  e(2 + e) / (2 + e(2 + e))
        e = jnp.exp(-jnp.abs(y))
        e2pe = e * (2.0 + e)
        num = jnp.where(y >= 0, 1.0 + 2.0 * e, e2pe)
        den = jnp.where(y >= 0, 1.0 + 2.0 * e + 2.0 * e * e, 2.0 + e2pe)
        t = num * pl.reciprocal(den, approx=True)
        o_ref[...] = (y * t).astype(o_ref.dtype)


def _pick_tm(M):
    """Row tile: aim for >=2 row tiles (keeps both v7x TCs busy) and MXU-friendly
    sizes, capped at 512 rows (safe under v7x's 64 MiB VMEM)."""
    if M >= 1024:
        return 512
    half = -(-M // 2)
    if half >= 256:
        return min(512, _round_up(half, 256))
    return max(8, _round_up(half, 8))


def _fused_matmul_bn_mish(patches, w_mat_scaled, bias):
    """patches: (M, KD) bf16, w_mat_scaled: (KD, CO) bf16 (BN scale folded),
    bias: (CO,) f32  ->  (M, CO) f32 with bias-add + Mish fused."""
    M, KD = patches.shape
    CO = w_mat_scaled.shape[1]

    COp = _round_up(CO, 128)
    tn = 256 if COp % 256 == 0 else 128          # lane-dense output-channel tile
    tk = min(256, _round_up(KD, 128))            # contraction tile
    KDp = _round_up(KD, tk)
    tm = _pick_tm(M)
    Mp = _round_up(M, tm)

    a = jnp.pad(patches, ((0, Mp - M), (0, KDp - KD)))                 # bf16
    b = jnp.pad(w_mat_scaled, ((0, KDp - KD), (0, COp - CO)))          # bf16
    bias2d = jnp.pad(bias.reshape(1, CO).astype(jnp.float32),
                     ((0, 0), (0, COp - CO)))

    itm = a.dtype.itemsize  # 2 (bf16)

    # Keep the whole (KDp, tn) weight slab resident in VMEM when small enough
    # (read from HBM exactly once); otherwise stream (tk, tn) tiles.
    resident_w = 2 * KDp * tn * itm <= 8 * 1024 * 1024
    if resident_w:
        b_spec = pl.BlockSpec((KDp, tn), lambda j, i, k: (0, j))
        b_block_bytes = 2 * KDp * tn * itm
    else:
        b_spec = pl.BlockSpec((tk, tn), lambda j, i, k: (k, j))
        b_block_bytes = 2 * tk * tn * itm

    grid = (COp // tn, Mp // tm, KDp // tk)      # (cout tiles, row tiles, reduction)

    # Double-buffered a + weight slab + bias + double-buffered f32 output block.
    vmem_bytes = (2 * tm * tk * itm + b_block_bytes + 2 * tn * 4 + 2 * tm * tn * 4)
    vmem_limit = int(min(max(2 * vmem_bytes, 32 * 1024 * 1024), 40 * 1024 * 1024))

    cost = pl.CostEstimate(
        flops=2 * Mp * KDp * COp,
        transcendentals=Mp * COp,
        bytes_accessed=((COp // tn) * Mp * KDp * itm    # patches (re-read per cout tile)
                        + KDp * COp * itm               # weights (read once)
                        + COp * 4 + Mp * COp * 4),      # bias + f32 output
    )

    out = pl.pallas_call(
        _conv_bn_mish_kernel,
        out_shape=jax.ShapeDtypeStruct((Mp, COp), jnp.float32),
        grid_spec=pltpu.PrefetchScalarGridSpec(
            num_scalar_prefetch=0,
            grid=grid,
            in_specs=[
                pl.BlockSpec((tm, tk), lambda j, i, k: (i, k)),
                b_spec,
                pl.BlockSpec((1, tn), lambda j, i, k: (0, j)),
            ],
            out_specs=pl.BlockSpec((tm, tn), lambda j, i, k: (i, j)),
        ),
        compiler_params=pltpu.CompilerParams(
            dimension_semantics=("parallel", "parallel", "arbitrary"),
            vmem_limit_bytes=vmem_limit,
        ),
        cost_estimate=cost,
    )(a, b, bias2d)

    return out[:M, :CO]


# ------------------------------ BasicConv ------------------------------------
@functools.partial(jax.jit, static_argnames=("stride",))
def basic_conv(x_nchw, weight, gamma, beta, running_mean, running_var,
               stride=1, eps=1e-5):
    """
    x_nchw:  (N, Cin, H, W)  float32
    weight:  (Cout, Cin, K, K)  (PyTorch Conv2d layout, bias=False)
    BN params: (Cout,) each.
    Returns (N, Cout, Ho, Wo) float32.
    """
    N, Cin, H, W = x_nchw.shape
    Cout, _, K, _ = weight.shape
    P = K // 2
    Ho = (H + 2 * P - K) // stride + 1
    Wo = (W + 2 * P - K) // stride + 1

    # Fold BN (inference) into per-channel scale/bias (f32).
    scale = gamma * jax.lax.rsqrt(running_var + eps)
    bias = beta - running_mean * scale

    # --- glue: cast to bf16 FIRST so the K*K-inflated im2col intermediate is
    # half the HBM traffic; then NCHW -> NHWC, pad, im2col (kh, kw, cin order) ---
    x = jnp.transpose(x_nchw, (0, 2, 3, 1)).astype(jnp.bfloat16)     # (N, H, W, Cin)
    x = jnp.pad(x, ((0, 0), (P, P), (P, P), (0, 0)))
    cols = []
    for kh in range(K):
        for kw in range(K):
            cols.append(x[:, kh:kh + stride * Ho:stride,
                            kw:kw + stride * Wo:stride, :])          # (N, Ho, Wo, Cin)
    patches = jnp.concatenate(cols, axis=-1)                         # (N, Ho, Wo, K*K*Cin)
    patches = patches.reshape(N * Ho * Wo, K * K * Cin)              # bf16

    # weight (Cout, Cin, K, K) -> (K, K, Cin, Cout) -> (K*K*Cin, Cout);
    # fold the BN scale into the weight columns (f32 math), then cast to bf16.
    w_mat = jnp.transpose(weight, (2, 3, 1, 0)).reshape(K * K * Cin, Cout)
    w_mat_scaled = (w_mat * scale[None, :]).astype(jnp.bfloat16)

    # --- hot path: fused matmul + BN bias + Mish in Pallas ---
    out_rows = _fused_matmul_bn_mish(patches, w_mat_scaled, bias)    # (N*Ho*Wo, Cout) f32

    out = out_rows.reshape(N, Ho, Wo, Cout)
    return jnp.transpose(out, (0, 3, 1, 2))                          # NCHW


# ------------------------------ reference ------------------------------------
def _reference(x_nchw, weight, gamma, beta, running_mean, running_var,
               stride=1, eps=1e-5, matmul_dtype=None):
    """Pure-JAX reference. If matmul_dtype is given, the conv inputs are rounded to
    that dtype first (mirrors the kernel's bf16 MXU inputs) so a tight tolerance
    check is meaningful."""
    K = weight.shape[-1]
    scale = gamma / jnp.sqrt(running_var + eps)
    bias = beta - running_mean * scale
    w = weight * scale.reshape(-1, 1, 1, 1)
    x = x_nchw
    if matmul_dtype is not None:
        x = x.astype(matmul_dtype).astype(jnp.float32)
        w = w.astype(matmul_dtype).astype(jnp.float32)
    y = jax.lax.conv_general_dilated(
        x, w,
        window_strides=(stride, stride),
        padding=[(K // 2, K // 2), (K // 2, K // 2)],
        dimension_numbers=("NCHW", "OIHW", "NCHW"),
        preferred_element_type=jnp.float32,
        precision=jax.lax.Precision.HIGHEST,
    )
    y = y + bias.reshape(1, -1, 1, 1)
    return y * jnp.tanh(jax.nn.softplus(y))


# --------------------------------- main ---------------------------------------
if __name__ == "__main__":
    key = jax.random.PRNGKey(0)
    k_x, k_w, k_g, k_b, k_m, k_v = jax.random.split(key, 6)

    # Small shapes consistent with BasicConv(in=4, out=8, kernel_size=3, stride=1)
    N, Cin, H, W = 2, 4, 16, 16
    Cout, K, stride = 8, 3, 1

    x = jax.random.normal(k_x, (N, Cin, H, W), dtype=jnp.float32)
    weight = 0.1 * jax.random.normal(k_w, (Cout, Cin, K, K), dtype=jnp.float32)
    gamma = 1.0 + 0.1 * jax.random.normal(k_g, (Cout,), dtype=jnp.float32)
    beta = 0.1 * jax.random.normal(k_b, (Cout,), dtype=jnp.float32)
    running_mean = 0.1 * jax.random.normal(k_m, (Cout,), dtype=jnp.float32)
    running_var = jnp.abs(1.0 + 0.1 * jax.random.normal(k_v, (Cout,), dtype=jnp.float32))

    out = basic_conv(x, weight, gamma, beta, running_mean, running_var, stride=stride)
    out = jax.block_until_ready(out)
    assert out.shape == (N, Cout, H, W), out.shape

    # Tight check vs. a reference with matching bf16 input rounding.
    ref_bf16 = jax.block_until_ready(
        _reference(x, weight, gamma, beta, running_mean, running_var,
                   stride=stride, matmul_dtype=jnp.bfloat16))
    assert jnp.allclose(out, ref_bf16, atol=5e-3, rtol=5e-3), \
        float(jnp.max(jnp.abs(out - ref_bf16)))

    # Loose sanity check vs. the full-f32 reference.
    ref_f32 = jax.block_until_ready(
        _reference(x, weight, gamma, beta, running_mean, running_var, stride=stride))
    assert jnp.allclose(out, ref_f32, atol=5e-2, rtol=5e-2), \
        float(jnp.max(jnp.abs(out - ref_f32)))

    print("KERNEL_OK")
</pallas_src>

<mosaic_0001>
module attributes {stable_mosaic.version = 11 : i64} {
  func.func @_conv_bn_mish_kernel(%arg0: i32, %arg1: i32, %arg2: i32, %arg3: memref<256x128xbf16, #tpu.memory_space<vmem>>, %arg4: memref<128x128xbf16, #tpu.memory_space<vmem>>, %arg5: memref<1x128xf32, #tpu.memory_space<vmem>>, %arg6: memref<256x128xf32, #tpu.memory_space<vmem>>) attributes {dimension_semantics = [#tpu.dimension_semantics<parallel>, #tpu.dimension_semantics<parallel>, #tpu.dimension_semantics<arbitrary>], iteration_bounds = array<i64: 1, 2, 1>, scalar_prefetch = 0 : i64, scratch_operands = 0 : i64, tpu.core_type = #tpu.core_type<tc>, window_params = [{transform_indices = @transform_0, window_bounds = array<i64: 256, 128>}, {transform_indices = @transform_1, window_bounds = array<i64: 128, 128>}, {transform_indices = @transform_2, window_bounds = array<i64: 1, 128>}, {transform_indices = @transform_3, window_bounds = array<i64: 256, 128>}]} {
    %c0_i32 = arith.constant 0 : i32
    %0 = arith.cmpi eq, %arg2, %c0_i32 : i32
    %1 = arith.extui %0 : i1 to i32
    %c0_i32_0 = arith.constant 0 : i32
    %2 = arith.cmpi ne, %1, %c0_i32_0 : i32
    scf.if %2 {
      %cst_10 = arith.constant 0.000000e+00 : f32
      %12 = vector.broadcast %cst_10 : f32 to vector<256x128xf32>
      %c0_11 = arith.constant 0 : index
      %c0_12 = arith.constant 0 : index
      %13 = vector.load %arg6[%c0_11, %c0_12] : memref<256x128xf32, #tpu.memory_space<vmem>>, vector<256x128xf32>
      tpu.vector_store %arg6[%c0_11, %c0_12], %12 {strides = array<i32>} : memref<256x128xf32, #tpu.memory_space<vmem>>, vector<256x128xf32>,
    } else {
    }
    %c0 = arith.constant 0 : index
    %c0_1 = arith.constant 0 : index
    %3 = vector.load %arg4[%c0, %c0_1] : memref<128x128xbf16, #tpu.memory_space<vmem>>, vector<128x128xbf16>
    %c0_2 = arith.constant 0 : index
    %c0_3 = arith.constant 0 : index
    %4 = vector.load %arg6[%c0_2, %c0_3] : memref<256x128xf32, #tpu.memory_space<vmem>>, vector<256x128xf32>
    %c0_4 = arith.constant 0 : index
    %c0_5 = arith.constant 0 : index
    %5 = vector.load %arg3[%c0_4, %c0_5] : memref<256x128xbf16, #tpu.memory_space<vmem>>, vector<256x128xbf16>
    %cst = arith.constant dense<0.000000e+00> : vector<256x128xf32>
    %6 = tpu.matmul %5, %3, %cst {dimension_numbers = #tpu.dot_dimension_numbers<[1], [0], [0], [1], [0, 0, 1, 1], [], []>} : vector<256x128xbf16>, vector<128x128xbf16>, vector<256x128xf32> -> vector<256x128xf32>
    %7 = arith.addf %4, %6 : vector<256x128xf32>
    %c0_6 = arith.constant 0 : index
    %c0_7 = arith.constant 0 : index
    %8 = vector.load %arg6[%c0_6, %c0_7] : memref<256x128xf32, #tpu.memory_space<vmem>>, vector<256x128xf32>
    tpu.vector_store %arg6[%c0_6, %c0_7], %7 {strides = array<i32>} : memref<256x128xf32, #tpu.memory_space<vmem>>, vector<256x128xf32>,
    %c0_i32_8 = arith.constant 0 : i32
    %9 = arith.cmpi eq, %arg2, %c0_i32_8 : i32
    %10 = arith.extui %9 : i1 to i32
    %c0_i32_9 = arith.constant 0 : i32
    %11 = arith.cmpi ne, %10, %c0_i32_9 : i32
    scf.if %11 {
      %c0_10 = arith.constant 0 : index
      %c0_11 = arith.constant 0 : index
      %12 = vector.load %arg6[%c0_10, %c0_11] : memref<256x128xf32, #tpu.memory_space<vmem>>, vector<256x128xf32>
      %c0_12 = arith.constant 0 : index
      %c0_13 = arith.constant 0 : index
      %13 = vector.load %arg5[%c0_12, %c0_13] : memref<1x128xf32, #tpu.memory_space<vmem>>, vector<1x128xf32>
      %14 = vector.broadcast %13 : vector<1x128xf32> to vector<256x128xf32>
      %15 = arith.addf %12, %14 : vector<256x128xf32>
      %16 = math.absf %15 : vector<256x128xf32>
      %cst_14 = arith.constant 0.000000e+00 : f32
      %17 = vector.broadcast %cst_14 : f32 to vector<256x128xf32>
      %18 = arith.subf %17, %16 : vector<256x128xf32>
      %19 = math.exp %18 : vector<256x128xf32>
      %cst_15 = arith.constant 2.000000e+00 : f32
      %20 = vector.broadcast %cst_15 : f32 to vector<256x128xf32>
      %21 = arith.addf %20, %19 : vector<256x128xf32>
      %22 = arith.mulf %19, %21 : vector<256x128xf32>
      %cst_16 = arith.constant 0.000000e+00 : f32
      %23 = vector.broadcast %cst_16 : f32 to vector<256x128xf32>
      %24 = arith.cmpf oge, %15, %23 : vector<256x128xf32>
      %cst_17 = arith.constant 2.000000e+00 : f32
      %25 = vector.broadcast %cst_17 : f32 to vector<256x128xf32>
      %26 = arith.mulf %25, %19 : vector<256x128xf32>
      %cst_18 = arith.constant 1.000000e+00 : f32
      %27 = vector.broadcast %cst_18 : f32 to vector<256x128xf32>
      %28 = arith.addf %27, %26 : vector<256x128xf32>
      %29 = arith.select %24, %28, %22 : vector<256x128xi1>, vector<256x128xf32>
      %cst_19 = arith.constant 0.000000e+00 : f32
      %30 = vector.broadcast %cst_19 : f32 to vector<256x128xf32>
      %31 = arith.cmpf oge, %15, %30 : vector<256x128xf32>
      %cst_20 = arith.constant 2.000000e+00 : f32
      %32 = vector.broadcast %cst_20 : f32 to vector<256x128xf32>
      %33 = arith.mulf %32, %19 : vector<256x128xf32>
      %cst_21 = arith.constant 1.000000e+00 : f32
      %34 = vector.broadcast %cst_21 : f32 to vector<256x128xf32>
      %35 = arith.addf %34, %33 : vector<256x128xf32>
      %cst_22 = arith.constant 2.000000e+00 : f32
      %36 = vector.broadcast %cst_22 : f32 to vector<256x128xf32>
      %37 = arith.mulf %36, %19 : vector<256x128xf32>
      %38 = arith.mulf %37, %19 : vector<256x128xf32>
      %39 = arith.addf %35, %38 : vector<256x128xf32>
      %cst_23 = arith.constant 2.000000e+00 : f32
      %40 = vector.broadcast %cst_23 : f32 to vector<256x128xf32>
      %41 = arith.addf %40, %22 : vector<256x128xf32>
      %42 = arith.select %31, %39, %41 : vector<256x128xi1>, vector<256x128xf32>
      %43 = tpu.reciprocal %42 {approx = true} : vector<256x128xf32> -> vector<256x128xf32>
      %44 = arith.mulf %29, %43 : vector<256x128xf32>
      %45 = arith.mulf %15, %44 : vector<256x128xf32>
      %c0_24 = arith.constant 0 : index
      %c0_25 = arith.constant 0 : index
      %46 = vector.load %arg6[%c0_24, %c0_25] : memref<256x128xf32, #tpu.memory_space<vmem>>, vector<256x128xf32>
      tpu.vector_store %arg6[%c0_24, %c0_25], %45 {strides = array<i32>} : memref<256x128xf32, #tpu.memory_space<vmem>>, vector<256x128xf32>,
    } else {
    }
    return
  }
  func.func @transform_0(%arg0: i32, %arg1: i32, %arg2: i32) -> (i32, i32) {
    %c0_i32 = arith.constant 0 : i32
    return %arg1, %arg2 : i32, i32
  }
  func.func @transform_1(%arg0: i32, %arg1: i32, %arg2: i32) -> (i32, i32) {
    %c0_i32 = arith.constant 0 : i32
    %c0_i32_0 = arith.constant 0 : i32
    return %c0_i32, %arg0 : i32, i32
  }
  func.func @transform_2(%arg0: i32, %arg1: i32, %arg2: i32) -> (i32, i32) {
    %c0_i32 = arith.constant 0 : i32
    %c0_i32_0 = arith.constant 0 : i32
    return %c0_i32, %arg0 : i32, i32
  }
  func.func @transform_3(%arg0: i32, %arg1: i32, %arg2: i32) -> (i32, i32) {
    %c0_i32 = arith.constant 0 : i32
    return %arg1, %arg0 : i32, i32
  }
}

</mosaic_0001>

<llo_original>
// kernel: basic_conv.1
$region0: #{basic_conv.1}
  #allocation0 [shape = 'u32[]', space=smem, size = 0x4, offset = 0x4, fixed_abs, tag = 'smem constant byte address 0x4 - core index']
  #allocation1 [shape = 'u32[144,128]{1,0:T(1,128)}', space=vmem, size = 0x12000, scoped, tag = 'internal scratch']
  %s0 = inlined_call_operand.vmem [shape: bf16[512,128], index: 0, kind: input, shape index: {}]
  %s1 = inlined_call_operand.vmem [shape: bf16[128,128], index: 1, kind: input, shape index: {}]
  %s2 = inlined_call_operand.vmem [shape: f32[1,128], index: 2, kind: input, shape index: {}]
  %s3 = inlined_call_operand.vmem [shape: f32[512,128], index: 3, kind: output, shape index: {}]
  %s4 = sld [smem:[#allocation0]]
  $region53: #{basic_conv.1} parent=0
    _
  %s6 = ssub.s32 1, %s4
  %s7 = scalar_select 0, %s6, %s4
  loop: start=0, step=1, limit=4
  $region2: #{basic_conv.1} parent=0 // loop_pre_header
    _
  $region3: #{basic_conv.1} parent=0 // loop_header
    %s9 = sphi 0, %s13
    %p10 = scmp.ge.s32.totalorder %s9, 4
    %s16 = sphi 0, %s35
    %s17 = sphi 0, %s31
    %s18 = sphi 0, %s27
    %s19 = sphi 0, %s16
    %s20 = sphi 0, %s17
    %s21 = sphi 0, %s18
    %s22 = sphi 0, %s19
    %s23 = sphi 0, %s20
    %s24 = sphi 0, %s21
    %s40 = sphi 0, %s42
    %s43 = sphi 0, %s40
    %s44 = sphi 0, %s43
    %s60 = sphi 0, %s44
    %s66 = sphi 0, %s68
    %s69 = sphi 0, %s66
    %s70 = sphi 0, %s69
    %s86 = sphi 0, %s70
    %s92 = sphi 0, %s94
    %s95 = sphi 0, %s92
    %s96 = sphi 0, %s95
    %s112 = sphi 0, %s96
    %s120 = sphi 0, %s122
    %s123 = sphi 0, %s120
    %s124 = sphi 0, %s123
    %s140 = sphi 0, %s124
  $region4: #{basic_conv.1} parent=0 // loop_header_branch
    %12 = sbr.rel (%p10) target = $region8
  $region5: #{basic_conv.1} parent=0 // loop_body
    %s14 = ssub.s32 %s9, 1
    %s15 = ssub.s32 %s9, 2
    %s25 = sadd.s32 1, %s18
    %p26 = scmp.ge.s32.totalorder %s25, 1
    %s27 = scalar_select %p26, 0, %s25
    %s28 = sadd.s32 1, %s17
    %s29 = scalar_select %p26, %s28, %s17
    %p30 = scmp.ge.s32.totalorder %s29, 2
    %s31 = scalar_select %p30, 0, %s29
    %s32 = sadd.s32 1, %s16
    %s33 = scalar_select %p30, %s32, %s16
    %p34 = scmp.ge.s32.totalorder %s33, 1
    %s35 = scalar_select %p34, 0, %s33
    %s36 = ssub.s32 %s17, %s31
    %s37 = ssub.s32 %s18, %s27
    %s38 = sor.u32 %s36, %s37
    %p39 = scmp.eq.s32.totalorder %s38, 0
    %s41 = sadd.s32 %s40, 1
    %s42 = scalar_select %p39, %s40, %s41
    %p45 = pneg %p39
    %p46 = scmp.eq.s32.totalorder %s9, 1
    %p47 = por %p45, %p46
    %p48 = scmp.ne.s32.totalorder %s40, %s43
    %p49 = scmp.eq.s32.totalorder %s9, 0
    %p50 = por %p48, %p49
    %p51 = scmp.ne.s32.totalorder %s40, %s43
    %p52 = scmp.eq.s32.totalorder %s14, 1
    %p53 = por %p51, %p52
    %p54 = scmp.ne.s32.totalorder %s43, %s44
    %p55 = scmp.eq.s32.totalorder %s14, 0
    %p56 = por %p54, %p55
    %p57 = scmp.ne.s32.totalorder %s43, %s44
    %p58 = scmp.eq.s32.totalorder %s15, 1
    %p59 = por %p57, %p58
    %p61 = scmp.ne.s32.totalorder %s44, %s60
    %p62 = scmp.eq.s32.totalorder %s15, 0
    %p63 = por %p61, %p62
    %s64 = ssub.s32 %s16, %s35
    %p65 = scmp.eq.s32.totalorder %s64, 0
    %s67 = sadd.s32 %s66, 1
    %s68 = scalar_select %p65, %s66, %s67
    %p71 = pneg %p65
    %p72 = scmp.eq.s32.totalorder %s9, 1
    %p73 = por %p71, %p72
    %p74 = scmp.ne.s32.totalorder %s66, %s69
    %p75 = scmp.eq.s32.totalorder %s9, 0
    %p76 = por %p74, %p75
    %p77 = scmp.ne.s32.totalorder %s66, %s69
    %p78 = scmp.eq.s32.totalorder %s14, 1
    %p79 = por %p77, %p78
    %p80 = scmp.ne.s32.totalorder %s69, %s70
    %p81 = scmp.eq.s32.totalorder %s14, 0
    %p82 = por %p80, %p81
    %p83 = scmp.ne.s32.totalorder %s69, %s70
    %p84 = scmp.eq.s32.totalorder %s15, 1
    %p85 = por %p83, %p84
    %p87 = scmp.ne.s32.totalorder %s70, %s86
    %p88 = scmp.eq.s32.totalorder %s15, 0
    %p89 = por %p87, %p88
    %s90 = ssub.s32 %s16, %s35
    %p91 = scmp.eq.s32.totalorder %s90, 0
    %s93 = sadd.s32 %s92, 1
    %s94 = scalar_select %p91, %s92, %s93
    %p97 = pneg %p91
    %p98 = scmp.eq.s32.totalorder %s9, 1
    %p99 = por %p97, %p98
    %p100 = scmp.ne.s32.totalorder %s92, %s95
    %p101 = scmp.eq.s32.totalorder %s9, 0
    %p102 = por %p100, %p101
    %p103 = scmp.ne.s32.totalorder %s92, %s95
    %p104 = scmp.eq.s32.totalorder %s14, 1
    %p105 = por %p103, %p104
    %p106 = scmp.ne.s32.totalorder %s95, %s96
    %p107 = scmp.eq.s32.totalorder %s14, 0
    %p108 = por %p106, %p107
    %p109 = scmp.ne.s32.totalorder %s95, %s96
    %p110 = scmp.eq.s32.totalorder %s15, 1
    %p111 = por %p109, %p110
    %p113 = scmp.ne.s32.totalorder %s96, %s112
    %p114 = scmp.eq.s32.totalorder %s15, 0
    %p115 = por %p113, %p114
    %s116 = ssub.s32 %s17, %s31
    %s117 = ssub.s32 %s16, %s35
    %s118 = sor.u32 %s116, %s117
    %p119 = scmp.eq.s32.totalorder %s118, 0
    %s121 = sadd.s32 %s120, 1
    %s122 = scalar_select %p119, %s120, %s121
    %p125 = pneg %p119
    %p126 = scmp.eq.s32.totalorder %s9, 1
    %p127 = por %p125, %p126
    %p128 = scmp.ne.s32.totalorder %s120, %s123
    %p129 = scmp.eq.s32.totalorder %s9, 0
    %p130 = por %p128, %p129
    %p131 = scmp.ne.s32.totalorder %s120, %s123
    %p132 = scmp.eq.s32.totalorder %s14, 1
    %p133 = por %p131, %p132
    %p134 = scmp.ne.s32.totalorder %s123, %s124
    %p135 = scmp.eq.s32.totalorder %s14, 0
    %p136 = por %p134, %p135
    %p137 = scmp.ne.s32.totalorder %s123, %s124
    %p138 = scmp.eq.s32.totalorder %s15, 1
    %p139 = por %p137, %p138
    %p141 = scmp.ne.s32.totalorder %s124, %s140
    %p142 = scmp.eq.s32.totalorder %s15, 0
    %p143 = por %p141, %p142
    %p144 = scmp.le.s32.totalorder 1, %s9
    %p145 = scmp.lt.s32.totalorder %s9, 3
    %p146 = pnand %p144, %p145
    %p147 = pneg %p146
    // Predicated region
    $region9: #{basic_conv.1} parent=5 // pred_check
      _
    $region10: #{basic_conv.1} parent=5 // pred_check_branch
      %149 = sbr.rel (%p146) target = $region12
    $region11: #{basic_conv.1} parent=5 // pred_region
      %s150 = ssub.s32 %s9, 1
      // Predicated region
      $region13: #{basic_conv.1} parent=11 // pred_check
        %p151 = pneg %p82
      $region14: #{basic_conv.1} parent=11 // pred_check_branch
        %153 = sbr.rel (%p151) target = $region16
      $region15: #{basic_conv.1} parent=11 // pred_region
        %p154 = scmp.lt.s32.totalorder %s19, 0
        %s155 = scalar_select %p154, %s19, 0
        %s156 = smul.addr %s155, 4
        %s157 = scalar_lea.vmem %s1, %s156
      $region16: #{basic_conv.1} parent=11 // pred_fallthru
        _
      // Predicated region
      $region17: #{basic_conv.1} parent=11 // pred_check
        %p158 = pneg %p108
      $region18: #{basic_conv.1} parent=11 // pred_check_branch
        %160 = sbr.rel (%p158) target = $region20
      $region19: #{basic_conv.1} parent=11 // pred_region
        %p161 = scmp.lt.s32.totalorder %s19, 0
        %s162 = scalar_select %p161, %s19, 0
        %s163 = scalar_lea.vmem %s2, %s162
      $region20: #{basic_conv.1} parent=11 // pred_fallthru
        _
    $region12: #{basic_conv.1} parent=5 // pred_fallthru
      _
    %p164 = scmp.lt.s32.totalorder %s9, 2
    // Predicated region
    $region21: #{basic_conv.1} parent=5 // pred_check
      %p165 = pneg %p164
    $region22: #{basic_conv.1} parent=5 // pred_check_branch
      %167 = sbr.rel (%p165) target = $region24
    $region23: #{basic_conv.1} parent=5 // pred_region
      // Predicated region
      $region25: #{basic_conv.1} parent=23 // pred_check
        %p168 = pneg %p50
      $region26: #{basic_conv.1} parent=23 // pred_check_branch
        %170 = sbr.rel (%p168) target = $region28
      $region27: #{basic_conv.1} parent=23 // pred_region
        %s171 = smul.u32 32, %s17
        %p172 = scmp.lt.s32.totalorder %s171, 63
        %s173 = scalar_select %p172, %s171, 63
        %p174 = scmp.lt.s32.totalorder %s18, 0
        %s175 = scalar_select %p174, %s18, 0
        %s176 = sadd.s32 %s175, %s173
        %s177 = smul.addr %s176, 4
        %s178 = scalar_lea.vmem %s0, %s177
        %s179 = smul.u32 32, %s17
      $region28: #{basic_conv.1} parent=23 // pred_fallthru
        _
    $region24: #{basic_conv.1} parent=5 // pred_fallthru
      _
    %p180 = scmp.le.s32.totalorder 1, %s9
    %p181 = scmp.lt.s32.totalorder %s9, 3
    %p182 = pnand %p180, %p181
    %p183 = pneg %p182
    // Predicated region
    $region29: #{basic_conv.1} parent=5 // pred_check
      _
    $region30: #{basic_conv.1} parent=5 // pred_check_branch
      %185 = sbr.rel (%p182) target = $region32
    $region31: #{basic_conv.1} parent=5 // pred_region
      %s186 = ssub.s32 %s9, 1
      %s187 = smul.u32 32, %s20
      %p188 = scmp.lt.s32.totalorder %s187, 63
      %s189 = scalar_select %p188, %s187, 63
      %p190 = scmp.lt.s32.totalorder %s21, 0
      %s191 = scalar_select %p190, %s21, 0
      %s192 = sadd.s32 %s191, %s189
      %s193 = smul.addr %s192, 4
      %s194 = scalar_lea.vmem %s0, %s193
      %p195 = pneg %p56
      %p196 = pneg %p53
      %p197 = scmp.lt.s32.totalorder %s19, 0
      %s198 = scalar_select %p197, %s19, 0
      %s199 = smul.addr %s198, 4
      %s200 = scalar_lea.vmem %s1, %s199
      %p201 = pneg %p82
      %p202 = pneg %p79
      %p203 = scmp.lt.s32.totalorder %s19, 0
      %s204 = scalar_select %p203, %s19, 0
      %s205 = scalar_lea.vmem %s2, %s204
      %p206 = pneg %p108
      %p207 = pneg %p105
      %p208 = pneg %p136
      %p209 = pneg %p133
      %s210 = smul.u32 32, %s20
      %p211 = scmp.lt.s32.totalorder %s210, 63
      %s212 = scalar_select %p211, %s210, 63
      %p213 = scmp.lt.s32.totalorder %s19, 0
      %s214 = scalar_select %p213, %s19, 0
      %s215 = sadd.s32 %s214, %s212
      %s216 = smul.addr %s215, 8
      %s217 = scalar_lea.vmem %s3, %s216
      %s218 = smul.u32 32, %s20
      %p219 = scmp.lt.s32.totalorder %s218, 63
      %s220 = scalar_select %p219, %s218, 63
      %p221 = scmp.lt.s32.totalorder %s21, 0
      %s222 = scalar_select %p221, %s21, 0
      %s223 = sadd.s32 %s222, %s220
      %s224 = smul.addr %s223, 4
      %s225 = scalar_lea.vmem %s0, %s224
      %s226 = smul.u32 32, %s20
      %p227 = scmp.lt.s32.totalorder %s19, 0
      %s228 = scalar_select %p227, %s19, 0
      %s229 = smul.addr %s228, 4
      %s230 = scalar_lea.vmem %s1, %s229
      %p231 = scmp.lt.s32.totalorder %s19, 0
      %s232 = scalar_select %p231, %s19, 0
      %s233 = scalar_lea.vmem %s2, %s232
      %s234 = smul.u32 32, %s20
      %p235 = scmp.lt.s32.totalorder %s234, 63
      %s236 = scalar_select %p235, %s234, 63
      %p237 = scmp.lt.s32.totalorder %s19, 0
      %s238 = scalar_select %p237, %s19, 0
      %s239 = sadd.s32 %s238, %s236
      %s240 = smul.addr %s239, 8
      %s241 = scalar_lea.vmem %s3, %s240
      %s242 = smul.u32 32, %s20
      %p244 = scmp.eq.s32.totalorder %s21, 0
      // Predicated region
      $region33: #{basic_conv.1} parent=31 // pred_check
        %p245 = pneg %p244
      $region34: #{basic_conv.1} parent=31 // pred_check_branch
        %247 = sbr.rel (%p245) target = $region36
      $region35: #{basic_conv.1} parent=31 // pred_region
        %248 = vst [vmem:[%s241] sm:$0xff] 0.0
        %249 = vst [vmem:[%s241 + $0x8] sm:$0xff] 0.0
        %250 = vst [vmem:[%s241 + $0x10] sm:$0xff] 0.0
        %251 = vst [vmem:[%s241 + $0x18] sm:$0xff] 0.0
        %252 = vst [vmem:[%s241 + $0x20] sm:$0xff] 0.0
        %253 = vst [vmem:[%s241 + $0x28] sm:$0xff] 0.0
        %254 = vst [vmem:[%s241 + $0x30] sm:$0xff] 0.0
        %255 = vst [vmem:[%s241 + $0x38] sm:$0xff] 0.0
        %256 = vst [vmem:[%s241 + $0x40] sm:$0xff] 0.0
        %257 = vst [vmem:[%s241 + $0x48] sm:$0xff] 0.0
        %258 = vst [vmem:[%s241 + $0x50] sm:$0xff] 0.0
        %259 = vst [vmem:[%s241 + $0x58] sm:$0xff] 0.0
        %260 = vst [vmem:[%s241 + $0x60] sm:$0xff] 0.0
        %261 = vst [vmem:[%s241 + $0x68] sm:$0xff] 0.0
        %262 = vst [vmem:[%s241 + $0x70] sm:$0xff] 0.0
        %263 = vst [vmem:[%s241 + $0x78] sm:$0xff] 0.0
        %264 = vst [vmem:[%s241 + $0x80] sm:$0xff] 0.0
        %265 = vst [vmem:[%s241 + $0x88] sm:$0xff] 0.0
        %266 = vst [vmem:[%s241 + $0x90] sm:$0xff] 0.0
        %267 = vst [vmem:[%s241 + $0x98] sm:$0xff] 0.0
        %268 = vst [vmem:[%s241 + $0xa0] sm:$0xff] 0.0
        %269 = vst [vmem:[%s241 + $0xa8] sm:$0xff] 0.0
        %270 = vst [vmem:[%s241 + $0xb0] sm:$0xff] 0.0
        %271 = vst [vmem:[%s241 + $0xb8] sm:$0xff] 0.0
        %272 = vst [vmem:[%s241 + $0xc0] sm:$0xff] 0.0
        %273 = vst [vmem:[%s241 + $0xc8] sm:$0xff] 0.0
        %274 = vst [vmem:[%s241 + $0xd0] sm:$0xff] 0.0
        %275 = vst [vmem:[%s241 + $0xd8] sm:$0xff] 0.0
        %276 = vst [vmem:[%s241 + $0xe0] sm:$0xff] 0.0
        %277 = vst [vmem:[%s241 + $0xe8] sm:$0xff] 0.0
        %278 = vst [vmem:[%s241 + $0xf0] sm:$0xff] 0.0
        %279 = vst [vmem:[%s241 + $0xf8] sm:$0xff] 0.0
      $region36: #{basic_conv.1} parent=31 // pred_fallthru
        _
      %v280 = vld [vmem:[%s230] sm:$0xf]
      %v281 = vld [vmem:[%s230 + $0x4] sm:$0xf]
      %v282 = vld [vmem:[%s230 + $0x8] sm:$0xf]
      %v283 = vld [vmem:[%s230 + $0xc] sm:$0xf]
      %v284 = vld [vmem:[%s230 + $0x10] sm:$0xf]
      %v285 = vld [vmem:[%s230 + $0x14] sm:$0xf]
      %v286 = vld [vmem:[%s230 + $0x18] sm:$0xf]
      %v287 = vld [vmem:[%s230 + $0x1c] sm:$0xf]
      %v288 = vld [vmem:[%s230 + $0x20] sm:$0xf]
      %v289 = vld [vmem:[%s230 + $0x24] sm:$0xf]
      %v290 = vld [vmem:[%s230 + $0x28] sm:$0xf]
      %v291 = vld [vmem:[%s230 + $0x2c] sm:$0xf]
      %v292 = vld [vmem:[%s230 + $0x30] sm:$0xf]
      %v293 = vld [vmem:[%s230 + $0x34] sm:$0xf]
      %v294 = vld [vmem:[%s230 + $0x38] sm:$0xf]
      %v295 = vld [vmem:[%s230 + $0x3c] sm:$0xf]
      %v296 = vld [vmem:[%s241] sm:$0xff]
      %v297 = vld [vmem:[%s241 + $0x8] sm:$0xff]
      %v298 = vld [vmem:[%s241 + $0x10] sm:$0xff]
      %v299 = vld [vmem:[%s241 + $0x18] sm:$0xff]
      %v300 = vld [vmem:[%s241 + $0x20] sm:$0xff]
      %v301 = vld [vmem:[%s241 + $0x28] sm:$0xff]
      %v302 = vld [vmem:[%s241 + $0x30] sm:$0xff]
      %v303 = vld [vmem:[%s241 + $0x38] sm:$0xff]
      %v304 = vld [vmem:[%s241 + $0x40] sm:$0xff]
      %v305 = vld [vmem:[%s241 + $0x48] sm:$0xff]
      %v306 = vld [vmem:[%s241 + $0x50] sm:$0xff]
      %v307 = vld [vmem:[%s241 + $0x58] sm:$0xff]
      %v308 = vld [vmem:[%s241 + $0x60] sm:$0xff]
      %v309 = vld [vmem:[%s241 + $0x68] sm:$0xff]
      %v310 = vld [vmem:[%s241 + $0x70] sm:$0xff]
      %v311 = vld [vmem:[%s241 + $0x78] sm:$0xff]
      %v312 = vld [vmem:[%s241 + $0x80] sm:$0xff]
      %v313 = vld [vmem:[%s241 + $0x88] sm:$0xff]
      %v314 = vld [vmem:[%s241 + $0x90] sm:$0xff]
      %v315 = vld [vmem:[%s241 + $0x98] sm:$0xff]
      %v316 = vld [vmem:[%s241 + $0xa0] sm:$0xff]
      %v317 = vld [vmem:[%s241 + $0xa8] sm:$0xff]
      %v318 = vld [vmem:[%s241 + $0xb0] sm:$0xff]
      %v319 = vld [vmem:[%s241 + $0xb8] sm:$0xff]
      %v320 = vld [vmem:[%s241 + $0xc0] sm:$0xff]
      %v321 = vld [vmem:[%s241 + $0xc8] sm:$0xff]
      %v322 = vld [vmem:[%s241 + $0xd0] sm:$0xff]
      %v323 = vld [vmem:[%s241 + $0xd8] sm:$0xff]
      %v324 = vld [vmem:[%s241 + $0xe0] sm:$0xff]
      %v325 = vld [vmem:[%s241 + $0xe8] sm:$0xff]
      %v326 = vld [vmem:[%s241 + $0xf0] sm:$0xff]
      %v327 = vld [vmem:[%s241 + $0xf8] sm:$0xff]
      %v328 = vld [vmem:[%s225] sm:$0xf]
      %v329 = vld [vmem:[%s225 + $0x4] sm:$0xf]
      %v330 = vld [vmem:[%s225 + $0x8] sm:$0xf]
      %v331 = vld [vmem:[%s225 + $0xc] sm:$0xf]
      %v332 = vld [vmem:[%s225 + $0x10] sm:$0xf]
      %v333 = vld [vmem:[%s225 + $0x14] sm:$0xf]
      %v334 = vld [vmem:[%s225 + $0x18] sm:$0xf]
      %v335 = vld [vmem:[%s225 + $0x1c] sm:$0xf]
      %v336 = vld [vmem:[%s225 + $0x20] sm:$0xf]
      %v337 = vld [vmem:[%s225 + $0x24] sm:$0xf]
      %v338 = vld [vmem:[%s225 + $0x28] sm:$0xf]
      %v339 = vld [vmem:[%s225 + $0x2c] sm:$0xf]
      %v340 = vld [vmem:[%s225 + $0x30] sm:$0xf]
      %v341 = vld [vmem:[%s225 + $0x34] sm:$0xf]
      %v342 = vld [vmem:[%s225 + $0x38] sm:$0xf]
      %v343 = vld [vmem:[%s225 + $0x3c] sm:$0xf]
      %v344 = vld [vmem:[%s225 + $0x40] sm:$0xf]
      %v345 = vld [vmem:[%s225 + $0x44] sm:$0xf]
      %v346 = vld [vmem:[%s225 + $0x48] sm:$0xf]
      %v347 = vld [vmem:[%s225 + $0x4c] sm:$0xf]
      %v348 = vld [vmem:[%s225 + $0x50] sm:$0xf]
      %v349 = vld [vmem:[%s225 + $0x54] sm:$0xf]
      %v350 = vld [vmem:[%s225 + $0x58] sm:$0xf]
      %v351 = vld [vmem:[%s225 + $0x5c] sm:$0xf]
      %v352 = vld [vmem:[%s225 + $0x60] sm:$0xf]
      %v353 = vld [vmem:[%s225 + $0x64] sm:$0xf]
      %v354 = vld [vmem:[%s225 + $0x68] sm:$0xf]
      %v355 = vld [vmem:[%s225 + $0x6c] sm:$0xf]
      %v356 = vld [vmem:[%s225 + $0x70] sm:$0xf]
      %v357 = vld [vmem:[%s225 + $0x74] sm:$0xf]
      %v358 = vld [vmem:[%s225 + $0x78] sm:$0xf]
      %v359 = vld [vmem:[%s225 + $0x7c] sm:$0xf]
      %v392 = vunpack.c.l.b16 %v328
      %v393 = vunpack.c.l.b16 %v329
      %v394 = vunpack.c.l.b16 %v330
      %v395 = vunpack.c.l.b16 %v331
      %v396 = vunpack.c.l.b16 %v332
      %v397 = vunpack.c.l.b16 %v333
      %v398 = vunpack.c.l.b16 %v334
      %v399 = vunpack.c.l.b16 %v335
      %v400 = vunpack.c.l.b16 %v336
      %v401 = vunpack.c.l.b16 %v337
      %v402 = vunpack.c.l.b16 %v338
      %v403 = vunpack.c.l.b16 %v339
      %v404 = vunpack.c.l.b16 %v340
      %v405 = vunpack.c.l.b16 %v341
      %v406 = vunpack.c.l.b16 %v342
      %v407 = vunpack.c.l.b16 %v343
      %v408 = vunpack.c.l.b16 %v344
      %v409 = vunpack.c.l.b16 %v345
      %v410 = vunpack.c.l.b16 %v346
      %v411 = vunpack.c.l.b16 %v347
      %v412 = vunpack.c.l.b16 %v348
      %v413 = vunpack.c.l.b16 %v349
      %v414 = vunpack.c.l.b16 %v350
      %v415 = vunpack.c.l.b16 %v351
      %v416 = vunpack.c.l.b16 %v352
      %v417 = vunpack.c.l.b16 %v353
      %v418 = vunpack.c.l.b16 %v354
      %v419 = vunpack.c.l.b16 %v355
      %v420 = vunpack.c.l.b16 %v356
      %v421 = vunpack.c.l.b16 %v357
      %v422 = vunpack.c.l.b16 %v358
      %v423 = vunpack.c.l.b16 %v359
      %v424 = vpack.c.b16 %v393, %v392
      %v425 = vpack.c.b16 %v395, %v394
      %v426 = vpack.c.b16 %v397, %v396
      %v427 = vpack.c.b16 %v399, %v398
      %v428 = vpack.c.b16 %v401, %v400
      %v429 = vpack.c.b16 %v403, %v402
      %v430 = vpack.c.b16 %v405, %v404
      %v431 = vpack.c.b16 %v407, %v406
      %v432 = vpack.c.b16 %v409, %v408
      %v433 = vpack.c.b16 %v411, %v410
      %v434 = vpack.c.b16 %v413, %v412
      %v435 = vpack.c.b16 %v415, %v414
      %v436 = vpack.c.b16 %v417, %v416
      %v437 = vpack.c.b16 %v419, %v418
      %v438 = vpack.c.b16 %v421, %v420
      %v439 = vpack.c.b16 %v423, %v422
      %v472 = vunpack.c.l.b16 %v280
      %v473 = vunpack.c.l.b16 %v281
      %v474 = vunpack.c.l.b16 %v282
      %v475 = vunpack.c.l.b16 %v283
      %v476 = vunpack.c.l.b16 %v284
      %v477 = vunpack.c.l.b16 %v285
      %v478 = vunpack.c.l.b16 %v286
      %v479 = vunpack.c.l.b16 %v287
      %v480 = vunpack.c.l.b16 %v288
      %v481 = vunpack.c.l.b16 %v289
      %v482 = vunpack.c.l.b16 %v290
      %v483 = vunpack.c.l.b16 %v291
      %v484 = vunpack.c.l.b16 %v292
      %v485 = vunpack.c.l.b16 %v293
      %v486 = vunpack.c.l.b16 %v294
      %v487 = vunpack.c.l.b16 %v295
      %v488 = vpack.c.b16 %v473, %v472
      %v489 = vpack.c.b16 %v475, %v474
      %v490 = vpack.c.b16 %v477, %v476
      %v491 = vpack.c.b16 %v479, %v478
      %v492 = vpack.c.b16 %v481, %v480
      %v493 = vpack.c.b16 %v483, %v482
      %v494 = vpack.c.b16 %v485, %v484
      %v495 = vpack.c.b16 %v487, %v486
      %504 = vmatprep.subr.bf16.mxu0 0
      %505 = vmatpush1.bf16.msra.mxu0 %v488
      %506 = vmatprep.subr.bf16.mxu0 0
      %507 = vmatpush1.bf16.msra.mxu0 %v489
      %508 = vmatprep.subr.bf16.mxu0 0
      %509 = vmatpush1.bf16.msra.mxu0 %v490
      %510 = vmatprep.subr.bf16.mxu0 0
      %511 = vmatpush1.bf16.msra.mxu0 %v491
      %512 = vmatprep.subr.bf16.mxu0 0
      %513 = vmatpush1.bf16.msra.mxu0 %v492
      %514 = vmatprep.subr.bf16.mxu0 0
      %515 = vmatpush1.bf16.msra.mxu0 %v493
      %516 = vmatprep.subr.bf16.mxu0 0
      %517 = vmatpush1.bf16.msra.mxu0 %v494
      %518 = vmatprep.subr.bf16.mxu0 0
      %519 = vmatpush1.bf16.msra.mxu0 %v495
      %520 = vmatprep.subr.bf16.mxu0 0
      %521 = vmatpush1.bf16.msra.mxu0 0
      %522 = vmatprep.subr.bf16.mxu0 0
      %523 = vmatpush1.bf16.msra.mxu0 0
      %524 = vmatprep.subr.bf16.mxu0 0
      %525 = vmatpush1.bf16.msra.mxu0 0
      %526 = vmatprep.subr.bf16.mxu0 0
      %527 = vmatpush1.bf16.msra.mxu0 0
      %528 = vmatprep.subr.bf16.mxu0 0
      %529 = vmatpush1.bf16.msra.mxu0 0
      %530 = vmatprep.subr.bf16.mxu0 0
      %531 = vmatpush1.bf16.msra.mxu0 0
      %532 = vmatprep.subr.bf16.mxu0 0
      %533 = vmatpush1.bf16.msra.mxu0 0
      %534 = vmatprep.subr.bf16.mxu0 0
      %535 = vmatpush1.bf16.msra.mxu0 0
      %536 = vmatprep.mubr.bf16.mxu0 0
      %537 = vmatmul.mubr.bf16.gmra.mrb[0].mxu0 %v424
      %v538 = vpop.f32.mrb[0].mxu0
      %v539 = vadd.f32 0.0, %v538
      %v540 = vpop.f32.mrb[0].mxu0
      %v541 = vpop.f32.mrb[0].mxu0
      %v542 = vadd.f32 0.0, %v541
      %v543 = vpop.f32.mrb[0].mxu0
      %544 = vmatprep.mubr.bf16.mxu0 0
      %545 = vmatmul.mubr.bf16.gmra.mrb[0].mxu0 %v425
      %v546 = vpop.f32.mrb[0].mxu0
      %v547 = vadd.f32 0.0, %v546
      %v548 = vpop.f32.mrb[0].mxu0
      %v549 = vpop.f32.mrb[0].mxu0
      %v550 = vadd.f32 0.0, %v549
      %v551 = vpop.f32.mrb[0].mxu0
      %552 = vmatprep.mubr.bf16.mxu0 0
      %553 = vmatmul.mubr.bf16.gmra.mrb[0].mxu0 %v426
      %v554 = vpop.f32.mrb[0].mxu0
      %v555 = vadd.f32 0.0, %v554
      %v556 = vpop.f32.mrb[0].mxu0
      %v557 = vpop.f32.mrb[0].mxu0
      %v558 = vadd.f32 0.0, %v557
      %v559 = vpop.f32.mrb[0].mxu0
      %560 = vmatprep.mubr.bf16.mxu0 0
      %561 = vmatmul.mubr.bf16.gmra.mrb[0].mxu0 %v427
      %v562 = vpop.f32.mrb[0].mxu0
      %v563 = vadd.f32 0.0, %v562
      %v564 = vpop.f32.mrb[0].mxu0
      %v565 = vpop.f32.mrb[0].mxu0
      %v566 = vadd.f32 0.0, %v565
      %v567 = vpop.f32.mrb[0].mxu0
      %568 = vmatprep.mubr.bf16.mxu0 0
      %569 = vmatmul.mubr.bf16.gmra.mrb[0].mxu0 %v428
      %v570 = vpop.f32.mrb[0].mxu0
      %v571 = vadd.f32 0.0, %v570
      %v572 = vpop.f32.mrb[0].mxu0
      %v573 = vpop.f32.mrb[0].mxu0
      %v574 = vadd.f32 0.0, %v573
      %v575 = vpop.f32.mrb[0].mxu0
      %576 = vmatprep.mubr.bf16.mxu0 0
      %577 = vmatmul.mubr.bf16.gmra.mrb[0].mxu0 %v429
      %v578 = vpop.f32.mrb[0].mxu0
      %v579 = vadd.f32 0.0, %v578
      %v580 = vpop.f32.mrb[0].mxu0
      %v581 = vpop.f32.mrb[0].mxu0
      %v582 = vadd.f32 0.0, %v581
      %v583 = vpop.f32.mrb[0].mxu0
      %584 = vmatprep.mubr.bf16.mxu0 0
      %585 = vmatmul.mubr.bf16.gmra.mrb[0].mxu0 %v430
      %v586 = vpop.f32.mrb[0].mxu0
      %v587 = vadd.f32 0.0, %v586
      %v588 = vpop.f32.mrb[0].mxu0
      %v589 = vpop.f32.mrb[0].mxu0
      %v590 = vadd.f32 0.0, %v589
      %v591 = vpop.f32.mrb[0].mxu0
      %592 = vmatprep.mubr.bf16.mxu0 0
      %593 = vmatmul.mubr.bf16.gmra.mrb[0].mxu0 %v431
      %v594 = vpop.f32.mrb[0].mxu0
      %v595 = vadd.f32 0.0, %v594
      %v596 = vpop.f32.mrb[0].mxu0
      %v597 = vpop.f32.mrb[0].mxu0
      %v598 = vadd.f32 0.0, %v597
      %v599 = vpop.f32.mrb[0].mxu0
      %600 = vmatprep.mubr.bf16.mxu0 0
      %601 = vmatmul.mubr.bf16.gmra.mrb[0].mxu0 %v432
      %v602 = vpop.f32.mrb[0].mxu0
      %v603 = vadd.f32 0.0, %v602
      %v604 = vpop.f32.mrb[0].mxu0
      %v605 = vpop.f32.mrb[0].mxu0
      %v606 = vadd.f32 0.0, %v605
      %v607 = vpop.f32.mrb[0].mxu0
      %608 = vmatprep.mubr.bf16.mxu0 0
      %609 = vmatmul.mubr.bf16.gmra.mrb[0].mxu0 %v433
      %v610 = vpop.f32.mrb[0].mxu0
      %v611 = vadd.f32 0.0, %v610
      %v612 = vpop.f32.mrb[0].mxu0
      %v613 = vpop.f32.mrb[0].mxu0
      %v614 = vadd.f32 0.0, %v613
      %v615 = vpop.f32.mrb[0].mxu0
      %616 = vmatprep.mubr.bf16.mxu0 0
      %617 = vmatmul.mubr.bf16.gmra.mrb[0].mxu0 %v434
      %v618 = vpop.f32.mrb[0].mxu0
      %v619 = vadd.f32 0.0, %v618
      %v620 = vpop.f32.mrb[0].mxu0
      %v621 = vpop.f32.mrb[0].mxu0
      %v622 = vadd.f32 0.0, %v621
      %v623 = vpop.f32.mrb[0].mxu0
      %624 = vmatprep.mubr.bf16.mxu0 0
      %625 = vmatmul.mubr.bf16.gmra.mrb[0].mxu0 %v435
      %v626 = vpop.f32.mrb[0].mxu0
      %v627 = vadd.f32 0.0, %v626
      %v628 = vpop.f32.mrb[0].mxu0
      %v629 = vpop.f32.mrb[0].mxu0
      %v630 = vadd.f32 0.0, %v629
      %v631 = vpop.f32.mrb[0].mxu0
      %632 = vmatprep.mubr.bf16.mxu0 0
      %633 = vmatmul.mubr.bf16.gmra.mrb[0].mxu0 %v436
      %v634 = vpop.f32.mrb[0].mxu0
      %v635 = vadd.f32 0.0, %v634
      %v636 = vpop.f32.mrb[0].mxu0
      %v637 = vpop.f32.mrb[0].mxu0
      %v638 = vadd.f32 0.0, %v637
      %v639 = vpop.f32.mrb[0].mxu0
      %640 = vmatprep.mubr.bf16.mxu0 0
      %641 = vmatmul.mubr.bf16.gmra.mrb[0].mxu0 %v437
      %v642 = vpop.f32.mrb[0].mxu0
      %v643 = vadd.f32 0.0, %v642
      %v644 = vpop.f32.mrb[0].mxu0
      %v645 = vpop.f32.mrb[0].mxu0
      %v646 = vadd.f32 0.0, %v645
      %v647 = vpop.f32.mrb[0].mxu0
      %648 = vmatprep.mubr.bf16.mxu0 0
      %649 = vmatmul.mubr.bf16.gmra.mrb[0].mxu0 %v438
      %v650 = vpop.f32.mrb[0].mxu0
      %v651 = vadd.f32 0.0, %v650
      %v652 = vpop.f32.mrb[0].mxu0
      %v653 = vpop.f32.mrb[0].mxu0
      %v654 = vadd.f32 0.0, %v653
      %v655 = vpop.f32.mrb[0].mxu0
      %656 = vmatprep.mubr.bf16.mxu0 0
      %657 = vmatmul.mubr.bf16.gmra.mrb[0].mxu0 %v439
      %v658 = vpop.f32.mrb[0].mxu0
      %v659 = vadd.f32 0.0, %v658
      %v660 = vpop.f32.mrb[0].mxu0
      %v661 = vpop.f32.mrb[0].mxu0
      %v662 = vadd.f32 0.0, %v661
      %v663 = vpop.f32.mrb[0].mxu0
      %664 = vdwg.mxu0
      %v665 = vadd.f32 %v296, %v539
      %v666 = vadd.f32 %v297, %v542
      %v667 = vadd.f32 %v298, %v547
      %v668 = vadd.f32 %v299, %v550
      %v669 = vadd.f32 %v300, %v555
      %v670 = vadd.f32 %v301, %v558
      %v671 = vadd.f32 %v302, %v563
      %v672 = vadd.f32 %v303, %v566
      %v673 = vadd.f32 %v304, %v571
      %v674 = vadd.f32 %v305, %v574
      %v675 = vadd.f32 %v306, %v579
      %v676 = vadd.f32 %v307, %v582
      %v677 = vadd.f32 %v308, %v587
      %v678 = vadd.f32 %v309, %v590
      %v679 = vadd.f32 %v310, %v595
      %v680 = vadd.f32 %v311, %v598
      %v681 = vadd.f32 %v312, %v603
      %v682 = vadd.f32 %v313, %v606
      %v683 = vadd.f32 %v314, %v611
      %v684 = vadd.f32 %v315, %v614
      %v685 = vadd.f32 %v316, %v619
      %v686 = vadd.f32 %v317, %v622
      %v687 = vadd.f32 %v318, %v627
      %v688 = vadd.f32 %v319, %v630
      %v689 = vadd.f32 %v320, %v635
      %v690 = vadd.f32 %v321, %v638
      %v691 = vadd.f32 %v322, %v643
      %v692 = vadd.f32 %v323, %v646
      %v693 = vadd.f32 %v324, %v651
      %v694 = vadd.f32 %v325, %v654
      %v695 = vadd.f32 %v326, %v659
      %v696 = vadd.f32 %v327, %v662
      %697 = vst [vmem:[%s241] sm:$0xff] %v665
      %698 = vst [vmem:[%s241 + $0x8] sm:$0xff] %v666
      %699 = vst [vmem:[%s241 + $0x10] sm:$0xff] %v667
      %700 = vst [vmem:[%s241 + $0x18] sm:$0xff] %v668
      %701 = vst [vmem:[%s241 + $0x20] sm:$0xff] %v669
      %702 = vst [vmem:[%s241 + $0x28] sm:$0xff] %v670
      %703 = vst [vmem:[%s241 + $0x30] sm:$0xff] %v671
      %704 = vst [vmem:[%s241 + $0x38] sm:$0xff] %v672
      %705 = vst [vmem:[%s241 + $0x40] sm:$0xff] %v673
      %706 = vst [vmem:[%s241 + $0x48] sm:$0xff] %v674
      %707 = vst [vmem:[%s241 + $0x50] sm:$0xff] %v675
      %708 = vst [vmem:[%s241 + $0x58] sm:$0xff] %v676
      %709 = vst [vmem:[%s241 + $0x60] sm:$0xff] %v677
      %710 = vst [vmem:[%s241 + $0x68] sm:$0xff] %v678
      %711 = vst [vmem:[%s241 + $0x70] sm:$0xff] %v679
      %712 = vst [vmem:[%s241 + $0x78] sm:$0xff] %v680
      %713 = vst [vmem:[%s241 + $0x80] sm:$0xff] %v681
      %714 = vst [vmem:[%s241 + $0x88] sm:$0xff] %v682
      %715 = vst [vmem:[%s241 + $0x90] sm:$0xff] %v683
      %716 = vst [vmem:[%s241 + $0x98] sm:$0xff] %v684
      %717 = vst [vmem:[%s241 + $0xa0] sm:$0xff] %v685
      %718 = vst [vmem:[%s241 + $0xa8] sm:$0xff] %v686
      %719 = vst [vmem:[%s241 + $0xb0] sm:$0xff] %v687
      %720 = vst [vmem:[%s241 + $0xb8] sm:$0xff] %v688
      %721 = vst [vmem:[%s241 + $0xc0] sm:$0xff] %v689
      %722 = vst [vmem:[%s241 + $0xc8] sm:$0xff] %v690
      %723 = vst [vmem:[%s241 + $0xd0] sm:$0xff] %v691
      %724 = vst [vmem:[%s241 + $0xd8] sm:$0xff] %v692
      %725 = vst [vmem:[%s241 + $0xe0] sm:$0xff] %v693
      %726 = vst [vmem:[%s241 + $0xe8] sm:$0xff] %v694
      %727 = vst [vmem:[%s241 + $0xf0] sm:$0xff] %v695
      %728 = vst [vmem:[%s241 + $0xf8] sm:$0xff] %v696
      // Predicated region
      $region37: #{basic_conv.1} parent=31 // pred_check
        %p729 = pneg %p244
      $region38: #{basic_conv.1} parent=31 // pred_check_branch
        %731 = sbr.rel (%p729) target = $region40
      $region39: #{basic_conv.1} parent=31 // pred_region
        %v732 = vld [vmem:[%s241] sm:$0xff]
        %v733 = vld [vmem:[%s241 + $0x8] sm:$0xff]
        %v734 = vld [vmem:[%s241 + $0x10] sm:$0xff]
        %v735 = vld [vmem:[%s241 + $0x18] sm:$0xff]
        %v736 = vld [vmem:[%s241 + $0x20] sm:$0xff]
        %v737 = vld [vmem:[%s241 + $0x28] sm:$0xff]
        %v738 = vld [vmem:[%s241 + $0x30] sm:$0xff]
        %v739 = vld [vmem:[%s241 + $0x38] sm:$0xff]
        %v740 = vld [vmem:[%s241 + $0x40] sm:$0xff]
        %v741 = vld [vmem:[%s241 + $0x48] sm:$0xff]
        %v742 = vld [vmem:[%s241 + $0x50] sm:$0xff]
        %v743 = vld [vmem:[%s241 + $0x58] sm:$0xff]
        %v744 = vld [vmem:[%s241 + $0x60] sm:$0xff]
        %v745 = vld [vmem:[%s241 + $0x68] sm:$0xff]
        %v746 = vld [vmem:[%s241 + $0x70] sm:$0xff]
        %v747 = vld [vmem:[%s241 + $0x78] sm:$0xff]
        %v748 = vld [vmem:[%s241 + $0x80] sm:$0xff]
        %v749 = vld [vmem:[%s241 + $0x88] sm:$0xff]
        %v750 = vld [vmem:[%s241 + $0x90] sm:$0xff]
        %v751 = vld [vmem:[%s241 + $0x98] sm:$0xff]
        %v752 = vld [vmem:[%s241 + $0xa0] sm:$0xff]
        %v753 = vld [vmem:[%s241 + $0xa8] sm:$0xff]
        %v754 = vld [vmem:[%s241 + $0xb0] sm:$0xff]
        %v755 = vld [vmem:[%s241 + $0xb8] sm:$0xff]
        %v756 = vld [vmem:[%s241 + $0xc0] sm:$0xff]
        %v757 = vld [vmem:[%s241 + $0xc8] sm:$0xff]
        %v758 = vld [vmem:[%s241 + $0xd0] sm:$0xff]
        %v759 = vld [vmem:[%s241 + $0xd8] sm:$0xff]
        %v760 = vld [vmem:[%s241 + $0xe0] sm:$0xff]
        %v761 = vld [vmem:[%s241 + $0xe8] sm:$0xff]
        %v762 = vld [vmem:[%s241 + $0xf0] sm:$0xff]
        %v763 = vld [vmem:[%s241 + $0xf8] sm:$0xff]
        %v764 = vld [vmem:[%s233] sm:$0x1]
        %v766 = vlaneseq
        %v767 = vshrl.u32 %v766, 7
        %v768 = vsub.s32 0, %v767
        %v769 = vrot.slane %v764, %v768
        %v771 = vadd.f32 %v732, %v769
        %v772 = vadd.f32 %v733, %v769
        %v773 = vadd.f32 %v734, %v769
        %v774 = vadd.f32 %v735, %v769
        %v775 = vadd.f32 %v736, %v769
        %v776 = vadd.f32 %v737, %v769
        %v777 = vadd.f32 %v738, %v769
        %v778 = vadd.f32 %v739, %v769
        %v779 = vadd.f32 %v740, %v769
        %v780 = vadd.f32 %v741, %v769
        %v781 = vadd.f32 %v742, %v769
        %v782 = vadd.f32 %v743, %v769
        %v783 = vadd.f32 %v744, %v769
        %v784 = vadd.f32 %v745, %v769
        %v785 = vadd.f32 %v746, %v769
        %v786 = vadd.f32 %v747, %v769
        %v787 = vadd.f32 %v748, %v769
        %v788 = vadd.f32 %v749, %v769
        %v789 = vadd.f32 %v750, %v769
        %v790 = vadd.f32 %v751, %v769
        %v791 = vadd.f32 %v752, %v769
        %v792 = vadd.f32 %v753, %v769
        %v793 = vadd.f32 %v754, %v769
        %v794 = vadd.f32 %v755, %v769
        %v795 = vadd.f32 %v756, %v769
        %v796 = vadd.f32 %v757, %v769
        %v797 = vadd.f32 %v758, %v769
        %v798 = vadd.f32 %v759, %v769
        %v799 = vadd.f32 %v760, %v769
        %v800 = vadd.f32 %v761, %v769
        %v801 = vadd.f32 %v762, %v769
        %v802 = vadd.f32 %v763, %v769
        %v803 = vand.u32 2147483647, %v771
        %v804 = vand.u32 2147483647, %v772
        %v805 = vand.u32 2147483647, %v773
        %v806 = vand.u32 2147483647, %v774
        %v807 = vand.u32 2147483647, %v775
        %v808 = vand.u32 2147483647, %v776
        %v809 = vand.u32 2147483647, %v777
        %v810 = vand.u32 2147483647, %v778
        %v811 = vand.u32 2147483647, %v779
        %v812 = vand.u32 2147483647, %v780
        %v813 = vand.u32 2147483647, %v781
        %v814 = vand.u32 2147483647, %v782
        %v815 = vand.u32 2147483647, %v783
        %v816 = vand.u32 2147483647, %v784
        %v817 = vand.u32 2147483647, %v785
        %v818 = vand.u32 2147483647, %v786
        %v819 = vand.u32 2147483647, %v787
        %v820 = vand.u32 2147483647, %v788
        %v821 = vand.u32 2147483647, %v789
        %v822 = vand.u32 2147483647, %v790
        %v823 = vand.u32 2147483647, %v791
        %v824 = vand.u32 2147483647, %v792
        %v825 = vand.u32 2147483647, %v793
        %v826 = vand.u32 2147483647, %v794
        %v827 = vand.u32 2147483647, %v795
        %v828 = vand.u32 2147483647, %v796
        %v829 = vand.u32 2147483647, %v797
        %v830 = vand.u32 2147483647, %v798
        %v831 = vand.u32 2147483647, %v799
        %v832 = vand.u32 2147483647, %v800
        %v833 = vand.u32 2147483647, %v801
        %v834 = vand.u32 2147483647, %v802
        %v835 = vsub.f32 0.0, %v803
        %v836 = vsub.f32 0.0, %v804
        %v837 = vsub.f32 0.0, %v805
        %v838 = vsub.f32 0.0, %v806
        %v839 = vsub.f32 0.0, %v807
        %v840 = vsub.f32 0.0, %v808
        %v841 = vsub.f32 0.0, %v809
        %v842 = vsub.f32 0.0, %v810
        %v843 = vsub.f32 0.0, %v811
        %v844 = vsub.f32 0.0, %v812
        %v845 = vsub.f32 0.0, %v813
        %v846 = vsub.f32 0.0, %v814
        %v847 = vsub.f32 0.0, %v815
        %v848 = vsub.f32 0.0, %v816
        %v849 = vsub.f32 0.0, %v817
        %v850 = vsub.f32 0.0, %v818
        %v851 = vsub.f32 0.0, %v819
        %v852 = vsub.f32 0.0, %v820
        %v853 = vsub.f32 0.0, %v821
        %v854 = vsub.f32 0.0, %v822
        %v855 = vsub.f32 0.0, %v823
        %v856 = vsub.f32 0.0, %v824
        %v857 = vsub.f32 0.0, %v825
        %v858 = vsub.f32 0.0, %v826
        %v859 = vsub.f32 0.0, %v827
        %v860 = vsub.f32 0.0, %v828
        %v861 = vsub.f32 0.0, %v829
        %v862 = vsub.f32 0.0, %v830
        %v863 = vsub.f32 0.0, %v831
        %v864 = vsub.f32 0.0, %v832
        %v865 = vsub.f32 0.0, %v833
        %v866 = vsub.f32 0.0, %v834
        %v867 = vmul.f32 %v835, 1.442695
        %v868 = vpow.pop %v867
        %v869 = vmul.f32 %v836, 1.442695
        %v870 = vpow.pop %v869
        %v871 = vmul.f32 %v837, 1.442695
        %v872 = vpow.pop %v871
        %v873 = vmul.f32 %v838, 1.442695
        %v874 = vpow.pop %v873
        %v875 = vmul.f32 %v839, 1.442695
        %v876 = vpow.pop %v875
        %v877 = vmul.f32 %v840, 1.442695
        %v878 = vpow.pop %v877
        %v879 = vmul.f32 %v841, 1.442695
        %v880 = vpow.pop %v879
        %v881 = vmul.f32 %v842, 1.442695
        %v882 = vpow.pop %v881
        %v883 = vmul.f32 %v843, 1.442695
        %v884 = vpow.pop %v883
        %v885 = vmul.f32 %v844, 1.442695
        %v886 = vpow.pop %v885
        %v887 = vmul.f32 %v845, 1.442695
        %v888 = vpow.pop %v887
        %v889 = vmul.f32 %v846, 1.442695
        %v890 = vpow.pop %v889
        %v891 = vmul.f32 %v847, 1.442695
        %v892 = vpow.pop %v891
        %v893 = vmul.f32 %v848, 1.442695
        %v894 = vpow.pop %v893
        %v895 = vmul.f32 %v849, 1.442695
        %v896 = vpow.pop %v895
        %v897 = vmul.f32 %v850, 1.442695
        %v898 = vpow.pop %v897
        %v899 = vmul.f32 %v851, 1.442695
        %v900 = vpow.pop %v899
        %v901 = vmul.f32 %v852, 1.442695
        %v902 = vpow.pop %v901
        %v903 = vmul.f32 %v853, 1.442695
        %v904 = vpow.pop %v903
        %v905 = vmul.f32 %v854, 1.442695
        %v906 = vpow.pop %v905
        %v907 = vmul.f32 %v855, 1.442695
        %v908 = vpow.pop %v907
        %v909 = vmul.f32 %v856, 1.442695
        %v910 = vpow.pop %v909
        %v911 = vmul.f32 %v857, 1.442695
        %v912 = vpow.pop %v911
        %v913 = vmul.f32 %v858, 1.442695
        %v914 = vpow.pop %v913
        %v915 = vmul.f32 %v859, 1.442695
        %v916 = vpow.pop %v915
        %v917 = vmul.f32 %v860, 1.442695
        %v918 = vpow.pop %v917
        %v919 = vmul.f32 %v861, 1.442695
        %v920 = vpow.pop %v919
        %v921 = vmul.f32 %v862, 1.442695
        %v922 = vpow.pop %v921
        %v923 = vmul.f32 %v863, 1.442695
        %v924 = vpow.pop %v923
        %v925 = vmul.f32 %v864, 1.442695
        %v926 = vpow.pop %v925
        %v927 = vmul.f32 %v865, 1.442695
        %v928 = vpow.pop %v927
        %v929 = vmul.f32 %v866, 1.442695
        %v930 = vpow.pop %v929
        %v931 = vadd.f32 %v868, 2.0
        %v932 = vadd.f32 %v870, 2.0
        %v933 = vadd.f32 %v872, 2.0
        %v934 = vadd.f32 %v874, 2.0
        %v935 = vadd.f32 %v876, 2.0
        %v936 = vadd.f32 %v878, 2.0
        %v937 = vadd.f32 %v880, 2.0
        %v938 = vadd.f32 %v882, 2.0
        %v939 = vadd.f32 %v884, 2.0
        %v940 = vadd.f32 %v886, 2.0
        %v941 = vadd.f32 %v888, 2.0
        %v942 = vadd.f32 %v890, 2.0
        %v943 = vadd.f32 %v892, 2.0
        %v944 = vadd.f32 %v894, 2.0
        %v945 = vadd.f32 %v896, 2.0
        %v946 = vadd.f32 %v898, 2.0
        %v947 = vadd.f32 %v900, 2.0
        %v948 = vadd.f32 %v902, 2.0
        %v949 = vadd.f32 %v904, 2.0
        %v950 = vadd.f32 %v906, 2.0
        %v951 = vadd.f32 %v908, 2.0
        %v952 = vadd.f32 %v910, 2.0
        %v953 = vadd.f32 %v912, 2.0
        %v954 = vadd.f32 %v914, 2.0
        %v955 = vadd.f32 %v916, 2.0
        %v956 = vadd.f32 %v918, 2.0
        %v957 = vadd.f32 %v920, 2.0
        %v958 = vadd.f32 %v922, 2.0
        %v959 = vadd.f32 %v924, 2.0
        %v960 = vadd.f32 %v926, 2.0
        %v961 = vadd.f32 %v928, 2.0
        %v962 = vadd.f32 %v930, 2.0
        %v963 = vmul.f32 %v868, %v931
        %v964 = vmul.f32 %v870, %v932
        %v965 = vmul.f32 %v872, %v933
        %v966 = vmul.f32 %v874, %v934
        %v967 = vmul.f32 %v876, %v935
        %v968 = vmul.f32 %v878, %v936
        %v969 = vmul.f32 %v880, %v937
        %v970 = vmul.f32 %v882, %v938
        %v971 = vmul.f32 %v884, %v939
        %v972 = vmul.f32 %v886, %v940
        %v973 = vmul.f32 %v888, %v941
        %v974 = vmul.f32 %v890, %v942
        %v975 = vmul.f32 %v892, %v943
        %v976 = vmul.f32 %v894, %v944
        %v977 = vmul.f32 %v896, %v945
        %v978 = vmul.f32 %v898, %v946
        %v979 = vmul.f32 %v900, %v947
        %v980 = vmul.f32 %v902, %v948
        %v981 = vmul.f32 %v904, %v949
        %v982 = vmul.f32 %v906, %v950
        %v983 = vmul.f32 %v908, %v951
        %v984 = vmul.f32 %v910, %v952
        %v985 = vmul.f32 %v912, %v953
        %v986 = vmul.f32 %v914, %v954
        %v987 = vmul.f32 %v916, %v955
        %v988 = vmul.f32 %v918, %v956
        %v989 = vmul.f32 %v920, %v957
        %v990 = vmul.f32 %v922, %v958
        %v991 = vmul.f32 %v924, %v959
        %v992 = vmul.f32 %v926, %v960
        %v993 = vmul.f32 %v928, %v961
        %v994 = vmul.f32 %v930, %v962
        %vm995 = vcmp.ge.f32.partialorder %v771, 0.0
        %vm996 = vcmp.ge.f32.partialorder %v772, 0.0
        %vm997 = vcmp.ge.f32.partialorder %v773, 0.0
        %vm998 = vcmp.ge.f32.partialorder %v774, 0.0
        %vm999 = vcmp.ge.f32.partialorder %v775, 0.0
        %vm1000 = vcmp.ge.f32.partialorder %v776, 0.0
        %vm1001 = vcmp.ge.f32.partialorder %v777, 0.0
        %vm1002 = vcmp.ge.f32.partialorder %v778, 0.0
        %vm1003 = vcmp.ge.f32.partialorder %v779, 0.0
        %vm1004 = vcmp.ge.f32.partialorder %v780, 0.0
        %vm1005 = vcmp.ge.f32.partialorder %v781, 0.0
        %vm1006 = vcmp.ge.f32.partialorder %v782, 0.0
        %vm1007 = vcmp.ge.f32.partialorder %v783, 0.0
        %vm1008 = vcmp.ge.f32.partialorder %v784, 0.0
        %vm1009 = vcmp.ge.f32.partialorder %v785, 0.0
        %vm1010 = vcmp.ge.f32.partialorder %v786, 0.0
        %vm1011 = vcmp.ge.f32.partialorder %v787, 0.0
        %vm1012 = vcmp.ge.f32.partialorder %v788, 0.0
        %vm1013 = vcmp.ge.f32.partialorder %v789, 0.0
        %vm1014 = vcmp.ge.f32.partialorder %v790, 0.0
        %vm1015 = vcmp.ge.f32.partialorder %v791, 0.0
        %vm1016 = vcmp.ge.f32.partialorder %v792, 0.0
        %vm1017 = vcmp.ge.f32.partialorder %v793, 0.0
        %vm1018 = vcmp.ge.f32.partialorder %v794, 0.0
        %vm1019 = vcmp.ge.f32.partialorder %v795, 0.0
        %vm1020 = vcmp.ge.f32.partialorder %v796, 0.0
        %vm1021 = vcmp.ge.f32.partialorder %v797, 0.0
        %vm1022 = vcmp.ge.f32.partialorder %v798, 0.0
        %vm1023 = vcmp.ge.f32.partialorder %v799, 0.0
        %vm1024 = vcmp.ge.f32.partialorder %v800, 0.0
        %vm1025 = vcmp.ge.f32.partialorder %v801, 0.0
        %vm1026 = vcmp.ge.f32.partialorder %v802, 0.0
        %v1027 = vmul.f32 %v868, 2.0
        %v1028 = vmul.f32 %v870, 2.0
        %v1029 = vmul.f32 %v872, 2.0
        %v1030 = vmul.f32 %v874, 2.0
        %v1031 = vmul.f32 %v876, 2.0
        %v1032 = vmul.f32 %v878, 2.0
        %v1033 = vmul.f32 %v880, 2.0
        %v1034 = vmul.f32 %v882, 2.0
        %v1035 = vmul.f32 %v884, 2.0
        %v1036 = vmul.f32 %v886, 2.0
        %v1037 = vmul.f32 %v888, 2.0
        %v1038 = vmul.f32 %v890, 2.0
        %v1039 = vmul.f32 %v892, 2.0
        %v1040 = vmul.f32 %v894, 2.0
        %v1041 = vmul.f32 %v896, 2.0
        %v1042 = vmul.f32 %v898, 2.0
        %v1043 = vmul.f32 %v900, 2.0
        %v1044 = vmul.f32 %v902, 2.0
        %v1045 = vmul.f32 %v904, 2.0
        %v1046 = vmul.f32 %v906, 2.0
        %v1047 = vmul.f32 %v908, 2.0
        %v1048 = vmul.f32 %v910, 2.0
        %v1049 = vmul.f32 %v912, 2.0
        %v1050 = vmul.f32 %v914, 2.0
        %v1051 = vmul.f32 %v916, 2.0
        %v1052 = vmul.f32 %v918, 2.0
        %v1053 = vmul.f32 %v920, 2.0
        %v1054 = vmul.f32 %v922, 2.0
        %v1055 = vmul.f32 %v924, 2.0
        %v1056 = vmul.f32 %v926, 2.0
        %v1057 = vmul.f32 %v928, 2.0
        %v1058 = vmul.f32 %v930, 2.0
        %v1059 = vadd.f32 %v1027, 1.0
        %v1060 = vadd.f32 %v1028, 1.0
        %v1061 = vadd.f32 %v1029, 1.0
        %v1062 = vadd.f32 %v1030, 1.0
        %v1063 = vadd.f32 %v1031, 1.0
        %v1064 = vadd.f32 %v1032, 1.0
        %v1065 = vadd.f32 %v1033, 1.0
        %v1066 = vadd.f32 %v1034, 1.0
        %v1067 = vadd.f32 %v1035, 1.0
        %v1068 = vadd.f32 %v1036, 1.0
        %v1069 = vadd.f32 %v1037, 1.0
        %v1070 = vadd.f32 %v1038, 1.0
        %v1071 = vadd.f32 %v1039, 1.0
        %v1072 = vadd.f32 %v1040, 1.0
        %v1073 = vadd.f32 %v1041, 1.0
        %v1074 = vadd.f32 %v1042, 1.0
        %v1075 = vadd.f32 %v1043, 1.0
        %v1076 = vadd.f32 %v1044, 1.0
        %v1077 = vadd.f32 %v1045, 1.0
        %v1078 = vadd.f32 %v1046, 1.0
        %v1079 = vadd.f32 %v1047, 1.0
        %v1080 = vadd.f32 %v1048, 1.0
        %v1081 = vadd.f32 %v1049, 1.0
        %v1082 = vadd.f32 %v1050, 1.0
        %v1083 = vadd.f32 %v1051, 1.0
        %v1084 = vadd.f32 %v1052, 1.0
        %v1085 = vadd.f32 %v1053, 1.0
        %v1086 = vadd.f32 %v1054, 1.0
        %v1087 = vadd.f32 %v1055, 1.0
        %v1088 = vadd.f32 %v1056, 1.0
        %v1089 = vadd.f32 %v1057, 1.0
        %v1090 = vadd.f32 %v1058, 1.0
        %v1091 = vsel %vm995, %v1059, %v963
        %v1092 = vsel %vm996, %v1060, %v964
        %v1093 = vsel %vm997, %v1061, %v965
        %v1094 = vsel %vm998, %v1062, %v966
        %v1095 = vsel %vm999, %v1063, %v967
        %v1096 = vsel %vm1000, %v1064, %v968
        %v1097 = vsel %vm1001, %v1065, %v969
        %v1098 = vsel %vm1002, %v1066, %v970
        %v1099 = vsel %vm1003, %v1067, %v971
        %v1100 = vsel %vm1004, %v1068, %v972
        %v1101 = vsel %vm1005, %v1069, %v973
        %v1102 = vsel %vm1006, %v1070, %v974
        %v1103 = vsel %vm1007, %v1071, %v975
        %v1104 = vsel %vm1008, %v1072, %v976
        %v1105 = vsel %vm1009, %v1073, %v977
        %v1106 = vsel %vm1010, %v1074, %v978
        %v1107 = vsel %vm1011, %v1075, %v979
        %v1108 = vsel %vm1012, %v1076, %v980
        %v1109 = vsel %vm1013, %v1077, %v981
        %v1110 = vsel %vm1014, %v1078, %v982
        %v1111 = vsel %vm1015, %v1079, %v983
        %v1112 = vsel %vm1016, %v1080, %v984
        %v1113 = vsel %vm1017, %v1081, %v985
        %v1114 = vsel %vm1018, %v1082, %v986
        %v1115 = vsel %vm1019, %v1083, %v987
        %v1116 = vsel %vm1020, %v1084, %v988
        %v1117 = vsel %vm1021, %v1085, %v989
        %v1118 = vsel %vm1022, %v1086, %v990
        %v1119 = vsel %vm1023, %v1087, %v991
        %v1120 = vsel %vm1024, %v1088, %v992
        %v1121 = vsel %vm1025, %v1089, %v993
        %v1122 = vsel %vm1026, %v1090, %v994
        %v1123 = vmul.f32 %v1027, %v868
        %v1124 = vmul.f32 %v1028, %v870
        %v1125 = vmul.f32 %v1029, %v872
        %v1126 = vmul.f32 %v1030, %v874
        %v1127 = vmul.f32 %v1031, %v876
        %v1128 = vmul.f32 %v1032, %v878
        %v1129 = vmul.f32 %v1033, %v880
        %v1130 = vmul.f32 %v1034, %v882
        %v1131 = vmul.f32 %v1035, %v884
        %v1132 = vmul.f32 %v1036, %v886
        %v1133 = vmul.f32 %v1037, %v888
        %v1134 = vmul.f32 %v1038, %v890
        %v1135 = vmul.f32 %v1039, %v892
        %v1136 = vmul.f32 %v1040, %v894
        %v1137 = vmul.f32 %v1041, %v896
        %v1138 = vmul.f32 %v1042, %v898
        %v1139 = vmul.f32 %v1043, %v900
        %v1140 = vmul.f32 %v1044, %v902
        %v1141 = vmul.f32 %v1045, %v904
        %v1142 = vmul.f32 %v1046, %v906
        %v1143 = vmul.f32 %v1047, %v908
        %v1144 = vmul.f32 %v1048, %v910
        %v1145 = vmul.f32 %v1049, %v912
        %v1146 = vmul.f32 %v1050, %v914
        %v1147 = vmul.f32 %v1051, %v916
        %v1148 = vmul.f32 %v1052, %v918
        %v1149 = vmul.f32 %v1053, %v920
        %v1150 = vmul.f32 %v1054, %v922
        %v1151 = vmul.f32 %v1055, %v924
        %v1152 = vmul.f32 %v1056, %v926
        %v1153 = vmul.f32 %v1057, %v928
        %v1154 = vmul.f32 %v1058, %v930
        %v1155 = vadd.f32 %v1059, %v1123
        %v1156 = vadd.f32 %v1060, %v1124
        %v1157 = vadd.f32 %v1061, %v1125
        %v1158 = vadd.f32 %v1062, %v1126
        %v1159 = vadd.f32 %v1063, %v1127
        %v1160 = vadd.f32 %v1064, %v1128
        %v1161 = vadd.f32 %v1065, %v1129
        %v1162 = vadd.f32 %v1066, %v1130
        %v1163 = vadd.f32 %v1067, %v1131
        %v1164 = vadd.f32 %v1068, %v1132
        %v1165 = vadd.f32 %v1069, %v1133
        %v1166 = vadd.f32 %v1070, %v1134
        %v1167 = vadd.f32 %v1071, %v1135
        %v1168 = vadd.f32 %v1072, %v1136
        %v1169 = vadd.f32 %v1073, %v1137
        %v1170 = vadd.f32 %v1074, %v1138
        %v1171 = vadd.f32 %v1075, %v1139
        %v1172 = vadd.f32 %v1076, %v1140
        %v1173 = vadd.f32 %v1077, %v1141
        %v1174 = vadd.f32 %v1078, %v1142
        %v1175 = vadd.f32 %v1079, %v1143
        %v1176 = vadd.f32 %v1080, %v1144
        %v1177 = vadd.f32 %v1081, %v1145
        %v1178 = vadd.f32 %v1082, %v1146
        %v1179 = vadd.f32 %v1083, %v1147
        %v1180 = vadd.f32 %v1084, %v1148
        %v1181 = vadd.f32 %v1085, %v1149
        %v1182 = vadd.f32 %v1086, %v1150
        %v1183 = vadd.f32 %v1087, %v1151
        %v1184 = vadd.f32 %v1088, %v1152
        %v1185 = vadd.f32 %v1089, %v1153
        %v1186 = vadd.f32 %v1090, %v1154
        %v1187 = vadd.f32 %v963, 2.0
        %v1188 = vadd.f32 %v964, 2.0
        %v1189 = vadd.f32 %v965, 2.0
        %v1190 = vadd.f32 %v966, 2.0
        %v1191 = vadd.f32 %v967, 2.0
        %v1192 = vadd.f32 %v968, 2.0
        %v1193 = vadd.f32 %v969, 2.0
        %v1194 = vadd.f32 %v970, 2.0
        %v1195 = vadd.f32 %v971, 2.0
        %v1196 = vadd.f32 %v972, 2.0
        %v1197 = vadd.f32 %v973, 2.0
        %v1198 = vadd.f32 %v974, 2.0
        %v1199 = vadd.f32 %v975, 2.0
        %v1200 = vadd.f32 %v976, 2.0
        %v1201 = vadd.f32 %v977, 2.0
        %v1202 = vadd.f32 %v978, 2.0
        %v1203 = vadd.f32 %v979, 2.0
        %v1204 = vadd.f32 %v980, 2.0
        %v1205 = vadd.f32 %v981, 2.0
        %v1206 = vadd.f32 %v982, 2.0
        %v1207 = vadd.f32 %v983, 2.0
        %v1208 = vadd.f32 %v984, 2.0
        %v1209 = vadd.f32 %v985, 2.0
        %v1210 = vadd.f32 %v986, 2.0
        %v1211 = vadd.f32 %v987, 2.0
        %v1212 = vadd.f32 %v988, 2.0
        %v1213 = vadd.f32 %v989, 2.0
        %v1214 = vadd.f32 %v990, 2.0
        %v1215 = vadd.f32 %v991, 2.0
        %v1216 = vadd.f32 %v992, 2.0
        %v1217 = vadd.f32 %v993, 2.0
        %v1218 = vadd.f32 %v994, 2.0
        %v1219 = vsel %vm995, %v1155, %v1187
        %v1220 = vsel %vm996, %v1156, %v1188
        %v1221 = vsel %vm997, %v1157, %v1189
        %v1222 = vsel %vm998, %v1158, %v1190
        %v1223 = vsel %vm999, %v1159, %v1191
        %v1224 = vsel %vm1000, %v1160, %v1192
        %v1225 = vsel %vm1001, %v1161, %v1193
        %v1226 = vsel %vm1002, %v1162, %v1194
        %v1227 = vsel %vm1003, %v1163, %v1195
        %v1228 = vsel %vm1004, %v1164, %v1196
        %v1229 = vsel %vm1005, %v1165, %v1197
        %v1230 = vsel %vm1006, %v1166, %v1198
        %v1231 = vsel %vm1007, %v1167, %v1199
        %v1232 = vsel %vm1008, %v1168, %v1200
        %v1233 = vsel %vm1009, %v1169, %v1201
        %v1234 = vsel %vm1010, %v1170, %v1202
        %v1235 = vsel %vm1011, %v1171, %v1203
        %v1236 = vsel %vm1012, %v1172, %v1204
        %v1237 = vsel %vm1013, %v1173, %v1205
        %v1238 = vsel %vm1014, %v1174, %v1206
        %v1239 = vsel %vm1015, %v1175, %v1207
        %v1240 = vsel %vm1016, %v1176, %v1208
        %v1241 = vsel %vm1017, %v1177, %v1209
        %v1242 = vsel %vm1018, %v1178, %v1210
        %v1243 = vsel %vm1019, %v1179, %v1211
        %v1244 = vsel %vm1020, %v1180, %v1212
        %v1245 = vsel %vm1021, %v1181, %v1213
        %v1246 = vsel %vm1022, %v1182, %v1214
        %v1247 = vsel %vm1023, %v1183, %v1215
        %v1248 = vsel %vm1024, %v1184, %v1216
        %v1249 = vsel %vm1025, %v1185, %v1217
        %v1250 = vsel %vm1026, %v1186, %v1218
        %v1251 = vrcp.pop %v1219
        %v1252 = vrcp.pop %v1220
        %v1253 = vrcp.pop %v1221
        %v1254 = vrcp.pop %v1222
        %v1255 = vrcp.pop %v1223
        %v1256 = vrcp.pop %v1224
        %v1257 = vrcp.pop %v1225
        %v1258 = vrcp.pop %v1226
        %v1259 = vrcp.pop %v1227
        %v1260 = vrcp.pop %v1228
        %v1261 = vrcp.pop %v1229
        %v1262 = vrcp.pop %v1230
        %v1263 = vrcp.pop %v1231
        %v1264 = vrcp.pop %v1232
        %v1265 = vrcp.pop %v1233
        %v1266 = vrcp.pop %v1234
        %v1267 = vrcp.pop %v1235
        %v1268 = vrcp.pop %v1236
        %v1269 = vrcp.pop %v1237
        %v1270 = vrcp.pop %v1238
        %v1271 = vrcp.pop %v1239
        %v1272 = vrcp.pop %v1240
        %v1273 = vrcp.pop %v1241
        %v1274 = vrcp.pop %v1242
        %v1275 = vrcp.pop %v1243
        %v1276 = vrcp.pop %v1244
        %v1277 = vrcp.pop %v1245
        %v1278 = vrcp.pop %v1246
        %v1279 = vrcp.pop %v1247
        %v1280 = vrcp.pop %v1248
        %v1281 = vrcp.pop %v1249
        %v1282 = vrcp.pop %v1250
        %v1283 = vmul.f32 %v1091, %v1251
        %v1284 = vmul.f32 %v1092, %v1252
        %v1285 = vmul.f32 %v1093, %v1253
        %v1286 = vmul.f32 %v1094, %v1254
        %v1287 = vmul.f32 %v1095, %v1255
        %v1288 = vmul.f32 %v1096, %v1256
        %v1289 = vmul.f32 %v1097, %v1257
        %v1290 = vmul.f32 %v1098, %v1258
        %v1291 = vmul.f32 %v1099, %v1259
        %v1292 = vmul.f32 %v1100, %v1260
        %v1293 = vmul.f32 %v1101, %v1261
        %v1294 = vmul.f32 %v1102, %v1262
        %v1295 = vmul.f32 %v1103, %v1263
        %v1296 = vmul.f32 %v1104, %v1264
        %v1297 = vmul.f32 %v1105, %v1265
        %v1298 = vmul.f32 %v1106, %v1266
        %v1299 = vmul.f32 %v1107, %v1267
        %v1300 = vmul.f32 %v1108, %v1268
        %v1301 = vmul.f32 %v1109, %v1269
        %v1302 = vmul.f32 %v1110, %v1270
        %v1303 = vmul.f32 %v1111, %v1271
        %v1304 = vmul.f32 %v1112, %v1272
        %v1305 = vmul.f32 %v1113, %v1273
        %v1306 = vmul.f32 %v1114, %v1274
        %v1307 = vmul.f32 %v1115, %v1275
        %v1308 = vmul.f32 %v1116, %v1276
        %v1309 = vmul.f32 %v1117, %v1277
        %v1310 = vmul.f32 %v1118, %v1278
        %v1311 = vmul.f32 %v1119, %v1279
        %v1312 = vmul.f32 %v1120, %v1280
        %v1313 = vmul.f32 %v1121, %v1281
        %v1314 = vmul.f32 %v1122, %v1282
        %v1315 = vmul.f32 %v771, %v1283
        %v1316 = vmul.f32 %v772, %v1284
        %v1317 = vmul.f32 %v773, %v1285
        %v1318 = vmul.f32 %v774, %v1286
        %v1319 = vmul.f32 %v775, %v1287
        %v1320 = vmul.f32 %v776, %v1288
        %v1321 = vmul.f32 %v777, %v1289
        %v1322 = vmul.f32 %v778, %v1290
        %v1323 = vmul.f32 %v779, %v1291
        %v1324 = vmul.f32 %v780, %v1292
        %v1325 = vmul.f32 %v781, %v1293
        %v1326 = vmul.f32 %v782, %v1294
        %v1327 = vmul.f32 %v783, %v1295
        %v1328 = vmul.f32 %v784, %v1296
        %v1329 = vmul.f32 %v785, %v1297
        %v1330 = vmul.f32 %v786, %v1298
        %v1331 = vmul.f32 %v787, %v1299
        %v1332 = vmul.f32 %v788, %v1300
        %v1333 = vmul.f32 %v789, %v1301
        %v1334 = vmul.f32 %v790, %v1302
        %v1335 = vmul.f32 %v791, %v1303
        %v1336 = vmul.f32 %v792, %v1304
        %v1337 = vmul.f32 %v793, %v1305
        %v1338 = vmul.f32 %v794, %v1306
        %v1339 = vmul.f32 %v795, %v1307
        %v1340 = vmul.f32 %v796, %v1308
        %v1341 = vmul.f32 %v797, %v1309
        %v1342 = vmul.f32 %v798, %v1310
        %v1343 = vmul.f32 %v799, %v1311
        %v1344 = vmul.f32 %v800, %v1312
        %v1345 = vmul.f32 %v801, %v1313
        %v1346 = vmul.f32 %v802, %v1314
        %1347 = vst [vmem:[%s241] sm:$0xff] %v1315
        %1348 = vst [vmem:[%s241 + $0x8] sm:$0xff] %v1316
        %1349 = vst [vmem:[%s241 + $0x10] sm:$0xff] %v1317
        %1350 = vst [vmem:[%s241 + $0x18] sm:$0xff] %v1318
        %1351 = vst [vmem:[%s241 + $0x20] sm:$0xff] %v1319
        %1352 = vst [vmem:[%s241 + $0x28] sm:$0xff] %v1320
        %1353 = vst [vmem:[%s241 + $0x30] sm:$0xff] %v1321
        %1354 = vst [vmem:[%s241 + $0x38] sm:$0xff] %v1322
        %1355 = vst [vmem:[%s241 + $0x40] sm:$0xff] %v1323
        %1356 = vst [vmem:[%s241 + $0x48] sm:$0xff] %v1324
        %1357 = vst [vmem:[%s241 + $0x50] sm:$0xff] %v1325
        %1358 = vst [vmem:[%s241 + $0x58] sm:$0xff] %v1326
        %1359 = vst [vmem:[%s241 + $0x60] sm:$0xff] %v1327
        %1360 = vst [vmem:[%s241 + $0x68] sm:$0xff] %v1328
        %1361 = vst [vmem:[%s241 + $0x70] sm:$0xff] %v1329
        %1362 = vst [vmem:[%s241 + $0x78] sm:$0xff] %v1330
        %1363 = vst [vmem:[%s241 + $0x80] sm:$0xff] %v1331
        %1364 = vst [vmem:[%s241 + $0x88] sm:$0xff] %v1332
        %1365 = vst [vmem:[%s241 + $0x90] sm:$0xff] %v1333
        %1366 = vst [vmem:[%s241 + $0x98] sm:$0xff] %v1334
        %1367 = vst [vmem:[%s241 + $0xa0] sm:$0xff] %v1335
        %1368 = vst [vmem:[%s241 + $0xa8] sm:$0xff] %v1336
        %1369 = vst [vmem:[%s241 + $0xb0] sm:$0xff] %v1337
        %1370 = vst [vmem:[%s241 + $0xb8] sm:$0xff] %v1338
        %1371 = vst [vmem:[%s241 + $0xc0] sm:$0xff] %v1339
        %1372 = vst [vmem:[%s241 + $0xc8] sm:$0xff] %v1340
        %1373 = vst [vmem:[%s241 + $0xd0] sm:$0xff] %v1341
        %1374 = vst [vmem:[%s241 + $0xd8] sm:$0xff] %v1342
        %1375 = vst [vmem:[%s241 + $0xe0] sm:$0xff] %v1343
        %1376 = vst [vmem:[%s241 + $0xe8] sm:$0xff] %v1344
        %1377 = vst [vmem:[%s241 + $0xf0] sm:$0xff] %v1345
        %1378 = vst [vmem:[%s241 + $0xf8] sm:$0xff] %v1346
      $region40: #{basic_conv.1} parent=31 // pred_fallthru
        _
      %s1379 = smul.u32 32, %s20
      %p1380 = scmp.lt.s32.totalorder %s1379, 63
      %s1381 = scalar_select %p1380, %s1379, 63
      %p1382 = scmp.lt.s32.totalorder %s19, 0
      %s1383 = scalar_select %p1382, %s19, 0
      %s1384 = sadd.s32 %s1383, %s1381
      %s1385 = smul.addr %s1384, 8
      %s1386 = scalar_lea.vmem %s3, %s1385
      // Predicated region
      $region41: #{basic_conv.1} parent=31 // pred_check
        %p1387 = pneg %p133
      $region42: #{basic_conv.1} parent=31 // pred_check_branch
        %1389 = sbr.rel (%p1387) target = $region44
      $region43: #{basic_conv.1} parent=31 // pred_region
        %s1390 = smul.u32 32, %s20
      $region44: #{basic_conv.1} parent=31 // pred_fallthru
        _
    $region32: #{basic_conv.1} parent=5 // pred_fallthru
      _
    %p1391 = scmp.le.s32.totalorder 2, %s9
    // Predicated region
    $region45: #{basic_conv.1} parent=5 // pred_check
      %p1392 = pneg %p1391
    $region46: #{basic_conv.1} parent=5 // pred_check_branch
      %1394 = sbr.rel (%p1392) target = $region48
    $region47: #{basic_conv.1} parent=5 // pred_region
      %s1395 = ssub.s32 %s9, 2
      // Predicated region
      $region49: #{basic_conv.1} parent=47 // pred_check
        %p1396 = pneg %p139
      $region50: #{basic_conv.1} parent=47 // pred_check_branch
        %1398 = sbr.rel (%p1396) target = $region52
      $region51: #{basic_conv.1} parent=47 // pred_region
        %s1399 = smul.u32 32, %s23
        %p1400 = scmp.lt.s32.totalorder %s1399, 63
        %s1401 = scalar_select %p1400, %s1399, 63
        %p1402 = scmp.lt.s32.totalorder %s22, 0
        %s1403 = scalar_select %p1402, %s22, 0
        %s1404 = sadd.s32 %s1403, %s1401
        %s1405 = smul.addr %s1404, 8
        %s1406 = scalar_lea.vmem %s3, %s1405
      $region52: #{basic_conv.1} parent=47 // pred_fallthru
        _
    $region48: #{basic_conv.1} parent=5 // pred_fallthru
      _
  $region6: #{basic_conv.1} parent=0 // loop_footer
    %s13 = sadd.s32 1, %s9
  $region7: #{basic_conv.1} parent=0 // loop_footer_branch
    %8 = sbr.rel target = $region3
  $region8: #{basic_conv.1} parent=0 // loop_exit
    _

</llo_original>
